<compile_context>
chip_gen: v7x
topology: tpu7x:2x2x1
jax: 0.10.0
libtpu: 0.0.40
codegen_flags: <defaults>
</compile_context>

<pallas_src>
import functools

import numpy as np

import jax
import jax.numpy as jnp
from jax.experimental import pallas as pl


def _round_up(v, m):
  return (v + m - 1) // m * m


# ---------------------------------------------------------------------------
# Fused discriminator + GAN-loss kernel (single pallas_call, everything in VMEM)
# ---------------------------------------------------------------------------
def _fused_disc_gan_kernel(
    x_ref,                              # (H*nrows, K1pad) f32 input slab
    w1c_ref, b1c_ref,                   # conv1: (3*K1pad, Wo1*C1) bf16, (1, Wo1*C1) f32
    w2c_ref, b2c_ref,                   # conv2
    w3c_ref, b3c_ref,                   # conv3
    wf1_ref, bf1_ref,                   # fc1:   (Ho3*Wo3*C3, 64) bf16, (1, 64) f32
    wf2_ref, bf2_ref,                   # fc2:   (1, 64) f32, (1, 1) f32
    out_ref,                            # (1, 2) f32: [loss_g, loss_d]
    *, nrows, batch, conv_dims, slope):

  def lrelu(v):                         # f32 element-wise (v5e-safe)
    return jnp.where(v >= 0.0, v, slope * v)

  def conv(act, w_ref, b_ref, hin, ho, stride):
    # act: (hin*nrows, K) f32, row = h*nrows + sample, lane = w*Cin + c.
    wc = act.shape[1]
    z = jnp.zeros((nrows, wc), act.dtype)

    def blk(hh):
      return act[hh * nrows:(hh + 1) * nrows, :]

    def blk_z(hh):                      # zero block for padding taps
      return z if (hh < 0 or hh >= hin) else blk(hh)

    if stride == 1:                     # taps are whole-slab shifts by one block
      above = jnp.concatenate([z, act[:(hin - 1) * nrows, :]], axis=0)   # h = i-1
      center = act                                                        # h = i
      below = jnp.concatenate([act[nrows:, :], z], axis=0)                # h = i+1
    else:                               # strided row gather, statically unrolled
      def tap(d):
        return jnp.concatenate([blk_z(i * stride + d - 1) for i in range(ho)],
                               axis=0)
      above, center, below = tap(0), tap(1), tap(2)

    # Fuse the 3 row taps into ONE MXU dot: (ho*nrows, 3*K) @ (3*K, Wo*Cout).
    lhs = jnp.concatenate([above, center, below], axis=1).astype(jnp.bfloat16)
    o = jnp.dot(lhs, w_ref[...], preferred_element_type=jnp.float32)
    return lrelu(o + b_ref[...])        # f32 activations

  (h1, o1, s1), (h2, o2, s2), (h3, o3, s3) = conv_dims
  a = x_ref[...]                                           # f32
  a = conv(a, w1c_ref, b1c_ref, h1, o1, s1)                # (o1*nrows, 128)
  a = conv(a, w2c_ref, b2c_ref, h2, o2, s2)                # (o2*nrows, 128)
  a = conv(a, w3c_ref, b3c_ref, h3, o3, s3)                # (o3*nrows, 128)

  # flatten (PyTorch view(N,-1) order folded into wf1) + fc1: one dot.
  lhs = jnp.concatenate([a[i * nrows:(i + 1) * nrows, :] for i in range(o3)],
                        axis=1).astype(jnp.bfloat16)       # (nrows, o3*128)
  y = jnp.dot(lhs, wf1_ref[...], preferred_element_type=jnp.float32)
  y = lrelu(y + bf1_ref[...])                              # (nrows, 64) f32

  # fc2: lane-axis reduction against the (1, 64) weight row -> (nrows, 1) logits
  logits = jnp.sum(y * wf2_ref[...], axis=-1, keepdims=True) + bf2_ref[...]

  # BCE-with-logits GAN losses (stable softplus); rows [0:b] fake, [b:2b] real,
  # remaining rows are batch padding and are simply not read.
  t = jnp.log(1.0 + jnp.exp(-jnp.abs(logits)))
  sp_pos = jnp.maximum(logits, 0.0) + t                    # softplus(x)
  sp_neg = jnp.maximum(-logits, 0.0) + t                   # softplus(-x)
  inv_b = 1.0 / batch
  loss_g = jnp.sum(sp_neg[:batch, :]) * inv_b                       # BCE(d_fake, 1)
  loss_d = (jnp.sum(sp_neg[batch:2 * batch, :]) +                   # BCE(d_real, 1)
            jnp.sum(sp_pos[:batch, :])) * inv_b                     # BCE(d_fake, 0)

  lane = jax.lax.broadcasted_iota(jnp.int32, (1, 2), 1)
  out_ref[...] = jnp.where(lane == 0, loss_g, loss_d)


# ---------------------------------------------------------------------------
# One-time weight repacking (batch-independent)
# ---------------------------------------------------------------------------
def _pack_conv(w, b, hin, win, stride, lane_align=128):
  """Lower a 3x3 pad=1 conv to one fused-tap matmul weight for the (H*rows, W*C)
  activation layout: rows for tap di live at lane offset di*K_pad."""
  w = np.asarray(w, np.float32)
  b = np.asarray(b, np.float32)
  cout, cin, kh, kw = w.shape
  pad = 1
  ho = (hin + 2 * pad - kh) // stride + 1
  wo = (win + 2 * pad - kw) // stride + 1
  k_in = win * cin
  k_pad = _round_up(k_in, lane_align)

  # E[w, j, dj] = 1 iff input column w feeds output column j through width-tap dj.
  e = np.zeros((win, wo, kw), np.float32)
  for j in range(wo):
    for dj in range(kw):
      col = j * stride + dj - pad
      if 0 <= col < win:
        e[col, j, dj] = 1.0
  # M[di, (w,c), (j,o)] = sum_dj E[w,j,dj] * W[o,c,di,dj]
  m = np.einsum("wjd,ocid->iwcjo", e, w).reshape(kh, k_in, wo * cout)
  m_pad = np.zeros((kh, k_pad, wo * cout), np.float32)
  m_pad[:, :k_in, :] = m
  m_fused = m_pad.reshape(kh * k_pad, wo * cout)           # taps stacked along K

  bias_row = np.tile(b, wo).reshape(1, wo * cout)
  return (jnp.asarray(m_fused, jnp.bfloat16),
          jnp.asarray(bias_row, jnp.float32), ho, wo, cout, k_pad)


def pack_discriminator(params, height, width):
  """One-time repack of all discriminator weights into fused-kernel operands."""
  m1, cb1, ho1, wo1, c1, _ = _pack_conv(*params["conv1"], hin=height, win=width, stride=1)
  m2, cb2, ho2, wo2, c2, k2 = _pack_conv(*params["conv2"], hin=ho1, win=wo1, stride=2)
  m3, cb3, ho3, wo3, c3, k3 = _pack_conv(*params["conv3"], hin=ho2, win=wo2, stride=2)
  # No inter-layer lane padding needed: previous layer's lane width must equal
  # the next conv's per-tap K.
  assert wo1 * c1 == k2 and wo2 * c2 == k3

  # fc1: reorder the PyTorch (c,h,w)-flattened weight to the kernel's
  # lane-concatenated (i, j, o) column layout.
  w1, b1 = params["fc1"]
  d1 = w1.shape[0]
  w1_4 = np.asarray(w1, np.float32).reshape(d1, c3, ho3, wo3)    # (u, o, i, j)
  wf1 = np.transpose(w1_4, (2, 3, 1, 0)).reshape(ho3 * wo3 * c3, d1)

  w2, b2 = params["fc2"]
  return {
      "w1c": m1, "b1c": cb1,
      "w2c": m2, "b2c": cb2,
      "w3c": m3, "b3c": cb3,
      "wf1": jnp.asarray(wf1, jnp.bfloat16),
      "bf1": jnp.asarray(np.asarray(b1, np.float32).reshape(1, d1)),
      "wf2": jnp.asarray(np.asarray(w2, np.float32).reshape(1, d1)),
      "bf2": jnp.asarray(np.asarray(b2, np.float32).reshape(1, 1)),
  }


# ---------------------------------------------------------------------------
# Discriminator parameters (small EDSR-style CNN classifier)
# ---------------------------------------------------------------------------
def init_discriminator_params(key):
  def conv_init(key, cout, cin, k):
    fan_in = cin * k * k
    w = jax.random.normal(key, (cout, cin, k, k), jnp.float32) / jnp.sqrt(fan_in)
    return w, jnp.zeros((cout,), jnp.float32)

  def lin_init(key, cout, cin):
    w = jax.random.normal(key, (cout, cin), jnp.float32) / jnp.sqrt(cin)
    return w, jnp.zeros((cout,), jnp.float32)

  ks = jax.random.split(key, 5)
  return {
      "conv1": conv_init(ks[0], 8, 3, 3),      # 16x16 -> 16x16
      "conv2": conv_init(ks[1], 16, 8, 3),     # 16x16 -> 8x8  (stride 2)
      "conv3": conv_init(ks[2], 32, 16, 3),    # 8x8   -> 4x4  (stride 2)
      "fc1": lin_init(ks[3], 64, 32 * 4 * 4),
      "fc2": lin_init(ks[4], 1, 64),
  }


# ---------------------------------------------------------------------------
# Adversarial.forward  (gan_type='GAN')
# ---------------------------------------------------------------------------
def adversarial_forward(fake, real, packed, gan_k=1):
  # TODO(synk): loss_d.backward() + Adam optimizer.step() (and WGAN weight
  # clamping) mutate discriminator/optimizer state via autograd — no clean
  # Pallas equivalent, so the discriminator is frozen.  With frozen weights all
  # gan_k iterations give the same loss_d and d_fake(fake) == d_fake(detach),
  # so one fused pass over the batched [fake; real] input suffices.
  del gan_k
  b = fake.shape[0]
  c_in, h, w = fake.shape[1], fake.shape[2], fake.shape[3]
  n_real = 2 * b
  nrows = _round_up(n_real, 8)                 # sublane-tile aligned row blocks

  x = jnp.concatenate([jax.lax.stop_gradient(fake), real], axis=0)     # (2B,C,H,W)
  if nrows != n_real:
    x = jnp.concatenate(
        [x, jnp.zeros((nrows - n_real,) + x.shape[1:], x.dtype)], axis=0)
  # (n, c, h, w) -> rows (h, n), cols (w, c): lane-dense 2-D activation slab.
  x_mat = jnp.transpose(x, (2, 0, 3, 1)).reshape(h * nrows, w * c_in)
  k_in = w * c_in
  k_pad = _round_up(k_in, 128)
  if k_pad != k_in:                            # pad conv1 lanes to 128
    x_mat = jnp.pad(x_mat, ((0, 0), (0, k_pad - k_in)))
  x_mat = x_mat.astype(jnp.float32)
  assert packed["w1c"].shape[0] == 3 * k_pad

  def cdim(i, s):
    return (i + 2 - 3) // s + 1
  ho1 = cdim(h, 1)
  ho2 = cdim(ho1, 2)
  ho3 = cdim(ho2, 2)
  conv_dims = ((h, ho1, 1), (ho1, ho2, 2), (ho2, ho3, 2))

  args = (x_mat,
          packed["w1c"], packed["b1c"],
          packed["w2c"], packed["b2c"],
          packed["w3c"], packed["b3c"],
          packed["wf1"], packed["bf1"],
          packed["wf2"], packed["bf2"])

  flops = 2 * (ho1 * nrows * packed["w1c"].shape[0] * packed["w1c"].shape[1]
               + ho2 * nrows * packed["w2c"].shape[0] * packed["w2c"].shape[1]
               + ho3 * nrows * packed["w3c"].shape[0] * packed["w3c"].shape[1]
               + nrows * packed["wf1"].shape[0] * packed["wf1"].shape[1])
  bytes_accessed = sum(int(a.size) * a.dtype.itemsize for a in args) + 8
  cost = pl.CostEstimate(flops=flops, transcendentals=2 * nrows,
                         bytes_accessed=bytes_accessed)

  kernel = functools.partial(_fused_disc_gan_kernel, nrows=nrows, batch=b,
                             conv_dims=conv_dims, slope=0.2)
  out = pl.pallas_call(
      kernel,
      out_shape=jax.ShapeDtypeStruct((1, 2), jnp.float32),
      cost_estimate=cost,
  )(*args)
  return out[0, 0], out[0, 1]                  # loss_g, loss_d


# ---------------------------------------------------------------------------
# Plain-JAX reference (for correctness verification only)
# ---------------------------------------------------------------------------
def _reference_discriminator(x, p):
  def conv(hh, w_, b_, stride):
    y = jax.lax.conv_general_dilated(
        hh, w_, window_strides=(stride, stride), padding=((1, 1), (1, 1)),
        dimension_numbers=("NCHW", "OIHW", "NCHW"))
    y = y + b_.reshape(1, -1, 1, 1)
    return jnp.where(y >= 0.0, y, 0.2 * y)

  hh = conv(x, *p["conv1"], 1)
  hh = conv(hh, *p["conv2"], 2)
  hh = conv(hh, *p["conv3"], 2)
  hh = hh.reshape(hh.shape[0], -1)
  w1, b1 = p["fc1"]
  hh = hh @ w1.T + b1
  hh = jnp.where(hh >= 0.0, hh, 0.2 * hh)
  w2, b2 = p["fc2"]
  return hh @ w2.T + b2


def _reference_losses(fake, real, params):
  sp = lambda z: jnp.maximum(z, 0.0) + jnp.log1p(jnp.exp(-jnp.abs(z)))
  d_fake = _reference_discriminator(fake, params)
  d_real = _reference_discriminator(real, params)
  loss_d = jnp.mean(sp(-d_real)) + jnp.mean(sp(d_fake))
  loss_g = jnp.mean(sp(-d_fake))
  return loss_g, loss_d


if __name__ == "__main__":
  B, C, H, W = 2, 3, 16, 16
  key = jax.random.PRNGKey(0)
  k_fake, k_real = jax.random.split(key)
  fake = jax.random.normal(k_fake, (B, C, H, W), dtype=jnp.float32)
  real = jax.random.normal(k_real, (B, C, H, W), dtype=jnp.float32)

  params = init_discriminator_params(jax.random.PRNGKey(42))
  packed = pack_discriminator(params, height=H, width=W)   # one-time repack

  fwd = jax.jit(adversarial_forward)
  loss_g, loss_d = fwd(fake, real, packed)
  jax.block_until_ready((loss_g, loss_d))

  # sanity check against a plain-JAX f32 reference (bf16 matmul operands)
  ref_g, ref_d = _reference_losses(fake, real, params)
  assert abs(float(loss_g) - float(ref_g)) < 5e-2, (float(loss_g), float(ref_g))
  assert abs(float(loss_d) - float(ref_d)) < 5e-2, (float(loss_d), float(ref_d))

  print("KERNEL_OK")
</pallas_src>

<mosaic_0001>
module attributes {stable_mosaic.version = 11 : i64} {
  func.func @_fused_disc_gan_kernel(%arg0: memref<128x128xf32, #tpu.memory_space<vmem>>, %arg1: memref<384x128xbf16, #tpu.memory_space<vmem>>, %arg2: memref<1x128xf32, #tpu.memory_space<vmem>>, %arg3: memref<384x128xbf16, #tpu.memory_space<vmem>>, %arg4: memref<1x128xf32, #tpu.memory_space<vmem>>, %arg5: memref<384x128xbf16, #tpu.memory_space<vmem>>, %arg6: memref<1x128xf32, #tpu.memory_space<vmem>>, %arg7: memref<512x64xbf16, #tpu.memory_space<vmem>>, %arg8: memref<1x64xf32, #tpu.memory_space<vmem>>, %arg9: memref<1x64xf32, #tpu.memory_space<vmem>>, %arg10: memref<1x1xf32, #tpu.memory_space<vmem>>, %arg11: memref<1x2xf32, #tpu.memory_space<vmem>>) attributes {dimension_semantics = [], scalar_prefetch = 0 : i64, scratch_operands = 0 : i64, tpu.core_type = #tpu.core_type<tc>} {
    %c0 = arith.constant 0 : index
    %c0_0 = arith.constant 0 : index
    %0 = vector.load %arg0[%c0, %c0_0] : memref<128x128xf32, #tpu.memory_space<vmem>>, vector<128x128xf32>
    %cst = arith.constant 0.000000e+00 : f32
    %1 = vector.broadcast %cst : f32 to vector<8x128xf32>
    %2 = vector.extract_strided_slice %0 {offsets = [0, 0], sizes = [120, 128], strides = [1, 1]} : vector<128x128xf32> to vector<120x128xf32>
    %3 = tpu.concatenate %1, %2 in 0 : vector<8x128xf32>, vector<120x128xf32> -> vector<128x128xf32>
    %4 = vector.extract_strided_slice %0 {offsets = [8, 0], sizes = [120, 128], strides = [1, 1]} : vector<128x128xf32> to vector<120x128xf32>
    %5 = tpu.concatenate %4, %1 in 0 : vector<120x128xf32>, vector<8x128xf32> -> vector<128x128xf32>
    %6 = tpu.concatenate %3, %0, %5 in 1 : vector<128x128xf32>, vector<128x128xf32>, vector<128x128xf32> -> vector<128x384xf32>
    %7 = arith.truncf %6 : vector<128x384xf32> to vector<128x384xbf16>
    %c0_1 = arith.constant 0 : index
    %c0_2 = arith.constant 0 : index
    %8 = vector.load %arg1[%c0_1, %c0_2] : memref<384x128xbf16, #tpu.memory_space<vmem>>, vector<384x128xbf16>
    %cst_3 = arith.constant dense<0.000000e+00> : vector<128x128xf32>
    %9 = tpu.matmul %7, %8, %cst_3 {dimension_numbers = #tpu.dot_dimension_numbers<[1], [0], [0], [1], [0, 0, 1, 1], [], []>} : vector<128x384xbf16>, vector<384x128xbf16>, vector<128x128xf32> -> vector<128x128xf32>
    %c0_4 = arith.constant 0 : index
    %c0_5 = arith.constant 0 : index
    %10 = vector.load %arg2[%c0_4, %c0_5] : memref<1x128xf32, #tpu.memory_space<vmem>>, vector<1x128xf32>
    %11 = vector.broadcast %10 : vector<1x128xf32> to vector<128x128xf32>
    %12 = arith.addf %9, %11 : vector<128x128xf32>
    %cst_6 = arith.constant 0.000000e+00 : f32
    %13 = vector.broadcast %cst_6 : f32 to vector<128x128xf32>
    %14 = arith.cmpf oge, %12, %13 : vector<128x128xf32>
    %cst_7 = arith.constant 2.000000e-01 : f32
    %15 = vector.broadcast %cst_7 : f32 to vector<128x128xf32>
    %16 = arith.mulf %15, %12 : vector<128x128xf32>
    %17 = arith.select %14, %12, %16 : vector<128x128xi1>, vector<128x128xf32>
    %cst_8 = arith.constant 0.000000e+00 : f32
    %18 = vector.broadcast %cst_8 : f32 to vector<8x128xf32>
    %19 = vector.extract_strided_slice %17 {offsets = [8, 0], sizes = [8, 128], strides = [1, 1]} : vector<128x128xf32> to vector<8x128xf32>
    %20 = vector.extract_strided_slice %17 {offsets = [24, 0], sizes = [8, 128], strides = [1, 1]} : vector<128x128xf32> to vector<8x128xf32>
    %21 = vector.extract_strided_slice %17 {offsets = [40, 0], sizes = [8, 128], strides = [1, 1]} : vector<128x128xf32> to vector<8x128xf32>
    %22 = vector.extract_strided_slice %17 {offsets = [56, 0], sizes = [8, 128], strides = [1, 1]} : vector<128x128xf32> to vector<8x128xf32>
    %23 = vector.extract_strided_slice %17 {offsets = [72, 0], sizes = [8, 128], strides = [1, 1]} : vector<128x128xf32> to vector<8x128xf32>
    %24 = vector.extract_strided_slice %17 {offsets = [88, 0], sizes = [8, 128], strides = [1, 1]} : vector<128x128xf32> to vector<8x128xf32>
    %25 = vector.extract_strided_slice %17 {offsets = [104, 0], sizes = [8, 128], strides = [1, 1]} : vector<128x128xf32> to vector<8x128xf32>
    %26 = tpu.concatenate %18, %19, %20, %21, %22, %23, %24, %25 in 0 : vector<8x128xf32>, vector<8x128xf32>, vector<8x128xf32>, vector<8x128xf32>, vector<8x128xf32>, vector<8x128xf32>, vector<8x128xf32>, vector<8x128xf32> -> vector<64x128xf32>
    %27 = vector.extract_strided_slice %17 {offsets = [0, 0], sizes = [8, 128], strides = [1, 1]} : vector<128x128xf32> to vector<8x128xf32>
    %28 = vector.extract_strided_slice %17 {offsets = [16, 0], sizes = [8, 128], strides = [1, 1]} : vector<128x128xf32> to vector<8x128xf32>
    %29 = vector.extract_strided_slice %17 {offsets = [32, 0], sizes = [8, 128], strides = [1, 1]} : vector<128x128xf32> to vector<8x128xf32>
    %30 = vector.extract_strided_slice %17 {offsets = [48, 0], sizes = [8, 128], strides = [1, 1]} : vector<128x128xf32> to vector<8x128xf32>
    %31 = vector.extract_strided_slice %17 {offsets = [64, 0], sizes = [8, 128], strides = [1, 1]} : vector<128x128xf32> to vector<8x128xf32>
    %32 = vector.extract_strided_slice %17 {offsets = [80, 0], sizes = [8, 128], strides = [1, 1]} : vector<128x128xf32> to vector<8x128xf32>
    %33 = vector.extract_strided_slice %17 {offsets = [96, 0], sizes = [8, 128], strides = [1, 1]} : vector<128x128xf32> to vector<8x128xf32>
    %34 = vector.extract_strided_slice %17 {offsets = [112, 0], sizes = [8, 128], strides = [1, 1]} : vector<128x128xf32> to vector<8x128xf32>
    %35 = tpu.concatenate %27, %28, %29, %30, %31, %32, %33, %34 in 0 : vector<8x128xf32>, vector<8x128xf32>, vector<8x128xf32>, vector<8x128xf32>, vector<8x128xf32>, vector<8x128xf32>, vector<8x128xf32>, vector<8x128xf32> -> vector<64x128xf32>
    %36 = vector.extract_strided_slice %17 {offsets = [8, 0], sizes = [8, 128], strides = [1, 1]} : vector<128x128xf32> to vector<8x128xf32>
    %37 = vector.extract_strided_slice %17 {offsets = [24, 0], sizes = [8, 128], strides = [1, 1]} : vector<128x128xf32> to vector<8x128xf32>
    %38 = vector.extract_strided_slice %17 {offsets = [40, 0], sizes = [8, 128], strides = [1, 1]} : vector<128x128xf32> to vector<8x128xf32>
    %39 = vector.extract_strided_slice %17 {offsets = [56, 0], sizes = [8, 128], strides = [1, 1]} : vector<128x128xf32> to vector<8x128xf32>
    %40 = vector.extract_strided_slice %17 {offsets = [72, 0], sizes = [8, 128], strides = [1, 1]} : vector<128x128xf32> to vector<8x128xf32>
    %41 = vector.extract_strided_slice %17 {offsets = [88, 0], sizes = [8, 128], strides = [1, 1]} : vector<128x128xf32> to vector<8x128xf32>
    %42 = vector.extract_strided_slice %17 {offsets = [104, 0], sizes = [8, 128], strides = [1, 1]} : vector<128x128xf32> to vector<8x128xf32>
    %43 = vector.extract_strided_slice %17 {offsets = [120, 0], sizes = [8, 128], strides = [1, 1]} : vector<128x128xf32> to vector<8x128xf32>
    %44 = tpu.concatenate %36, %37, %38, %39, %40, %41, %42, %43 in 0 : vector<8x128xf32>, vector<8x128xf32>, vector<8x128xf32>, vector<8x128xf32>, vector<8x128xf32>, vector<8x128xf32>, vector<8x128xf32>, vector<8x128xf32> -> vector<64x128xf32>
    %45 = tpu.concatenate %26, %35, %44 in 1 : vector<64x128xf32>, vector<64x128xf32>, vector<64x128xf32> -> vector<64x384xf32>
    %46 = arith.truncf %45 : vector<64x384xf32> to vector<64x384xbf16>
    %c0_9 = arith.constant 0 : index
    %c0_10 = arith.constant 0 : index
    %47 = vector.load %arg3[%c0_9, %c0_10] : memref<384x128xbf16, #tpu.memory_space<vmem>>, vector<384x128xbf16>
    %cst_11 = arith.constant dense<0.000000e+00> : vector<64x128xf32>
    %48 = tpu.matmul %46, %47, %cst_11 {dimension_numbers = #tpu.dot_dimension_numbers<[1], [0], [0], [1], [0, 0, 1, 1], [], []>} : vector<64x384xbf16>, vector<384x128xbf16>, vector<64x128xf32> -> vector<64x128xf32>
    %c0_12 = arith.constant 0 : index
    %c0_13 = arith.constant 0 : index
    %49 = vector.load %arg4[%c0_12, %c0_13] : memref<1x128xf32, #tpu.memory_space<vmem>>, vector<1x128xf32>
    %50 = vector.broadcast %49 : vector<1x128xf32> to vector<64x128xf32>
    %51 = arith.addf %48, %50 : vector<64x128xf32>
    %cst_14 = arith.constant 0.000000e+00 : f32
    %52 = vector.broadcast %cst_14 : f32 to vector<64x128xf32>
    %53 = arith.cmpf oge, %51, %52 : vector<64x128xf32>
    %cst_15 = arith.constant 2.000000e-01 : f32
    %54 = vector.broadcast %cst_15 : f32 to vector<64x128xf32>
    %55 = arith.mulf %54, %51 : vector<64x128xf32>
    %56 = arith.select %53, %51, %55 : vector<64x128xi1>, vector<64x128xf32>
    %cst_16 = arith.constant 0.000000e+00 : f32
    %57 = vector.broadcast %cst_16 : f32 to vector<8x128xf32>
    %58 = vector.extract_strided_slice %56 {offsets = [8, 0], sizes = [8, 128], strides = [1, 1]} : vector<64x128xf32> to vector<8x128xf32>
    %59 = vector.extract_strided_slice %56 {offsets = [24, 0], sizes = [8, 128], strides = [1, 1]} : vector<64x128xf32> to vector<8x128xf32>
    %60 = vector.extract_strided_slice %56 {offsets = [40, 0], sizes = [8, 128], strides = [1, 1]} : vector<64x128xf32> to vector<8x128xf32>
    %61 = tpu.concatenate %57, %58, %59, %60 in 0 : vector<8x128xf32>, vector<8x128xf32>, vector<8x128xf32>, vector<8x128xf32> -> vector<32x128xf32>
    %62 = vector.extract_strided_slice %56 {offsets = [0, 0], sizes = [8, 128], strides = [1, 1]} : vector<64x128xf32> to vector<8x128xf32>
    %63 = vector.extract_strided_slice %56 {offsets = [16, 0], sizes = [8, 128], strides = [1, 1]} : vector<64x128xf32> to vector<8x128xf32>
    %64 = vector.extract_strided_slice %56 {offsets = [32, 0], sizes = [8, 128], strides = [1, 1]} : vector<64x128xf32> to vector<8x128xf32>
    %65 = vector.extract_strided_slice %56 {offsets = [48, 0], sizes = [8, 128], strides = [1, 1]} : vector<64x128xf32> to vector<8x128xf32>
    %66 = tpu.concatenate %62, %63, %64, %65 in 0 : vector<8x128xf32>, vector<8x128xf32>, vector<8x128xf32>, vector<8x128xf32> -> vector<32x128xf32>
    %67 = vector.extract_strided_slice %56 {offsets = [8, 0], sizes = [8, 128], strides = [1, 1]} : vector<64x128xf32> to vector<8x128xf32>
    %68 = vector.extract_strided_slice %56 {offsets = [24, 0], sizes = [8, 128], strides = [1, 1]} : vector<64x128xf32> to vector<8x128xf32>
    %69 = vector.extract_strided_slice %56 {offsets = [40, 0], sizes = [8, 128], strides = [1, 1]} : vector<64x128xf32> to vector<8x128xf32>
    %70 = vector.extract_strided_slice %56 {offsets = [56, 0], sizes = [8, 128], strides = [1, 1]} : vector<64x128xf32> to vector<8x128xf32>
    %71 = tpu.concatenate %67, %68, %69, %70 in 0 : vector<8x128xf32>, vector<8x128xf32>, vector<8x128xf32>, vector<8x128xf32> -> vector<32x128xf32>
    %72 = tpu.concatenate %61, %66, %71 in 1 : vector<32x128xf32>, vector<32x128xf32>, vector<32x128xf32> -> vector<32x384xf32>
    %73 = arith.truncf %72 : vector<32x384xf32> to vector<32x384xbf16>
    %c0_17 = arith.constant 0 : index
    %c0_18 = arith.constant 0 : index
    %74 = vector.load %arg5[%c0_17, %c0_18] : memref<384x128xbf16, #tpu.memory_space<vmem>>, vector<384x128xbf16>
    %cst_19 = arith.constant dense<0.000000e+00> : vector<32x128xf32>
    %75 = tpu.matmul %73, %74, %cst_19 {dimension_numbers = #tpu.dot_dimension_numbers<[1], [0], [0], [1], [0, 0, 1, 1], [], []>} : vector<32x384xbf16>, vector<384x128xbf16>, vector<32x128xf32> -> vector<32x128xf32>
    %c0_20 = arith.constant 0 : index
    %c0_21 = arith.constant 0 : index
    %76 = vector.load %arg6[%c0_20, %c0_21] : memref<1x128xf32, #tpu.memory_space<vmem>>, vector<1x128xf32>
    %77 = vector.broadcast %76 : vector<1x128xf32> to vector<32x128xf32>
    %78 = arith.addf %75, %77 : vector<32x128xf32>
    %cst_22 = arith.constant 0.000000e+00 : f32
    %79 = vector.broadcast %cst_22 : f32 to vector<32x128xf32>
    %80 = arith.cmpf oge, %78, %79 : vector<32x128xf32>
    %cst_23 = arith.constant 2.000000e-01 : f32
    %81 = vector.broadcast %cst_23 : f32 to vector<32x128xf32>
    %82 = arith.mulf %81, %78 : vector<32x128xf32>
    %83 = arith.select %80, %78, %82 : vector<32x128xi1>, vector<32x128xf32>
    %84 = vector.extract_strided_slice %83 {offsets = [0, 0], sizes = [8, 128], strides = [1, 1]} : vector<32x128xf32> to vector<8x128xf32>
    %85 = vector.extract_strided_slice %83 {offsets = [8, 0], sizes = [8, 128], strides = [1, 1]} : vector<32x128xf32> to vector<8x128xf32>
    %86 = vector.extract_strided_slice %83 {offsets = [16, 0], sizes = [8, 128], strides = [1, 1]} : vector<32x128xf32> to vector<8x128xf32>
    %87 = vector.extract_strided_slice %83 {offsets = [24, 0], sizes = [8, 128], strides = [1, 1]} : vector<32x128xf32> to vector<8x128xf32>
    %88 = tpu.concatenate %84, %85, %86, %87 in 1 : vector<8x128xf32>, vector<8x128xf32>, vector<8x128xf32>, vector<8x128xf32> -> vector<8x512xf32>
    %89 = arith.truncf %88 : vector<8x512xf32> to vector<8x512xbf16>
    %c0_24 = arith.constant 0 : index
    %c0_25 = arith.constant 0 : index
    %90 = vector.load %arg7[%c0_24, %c0_25] : memref<512x64xbf16, #tpu.memory_space<vmem>>, vector<512x64xbf16>
    %cst_26 = arith.constant dense<0.000000e+00> : vector<8x64xf32>
    %91 = tpu.matmul %89, %90, %cst_26 {dimension_numbers = #tpu.dot_dimension_numbers<[1], [0], [0], [1], [0, 0, 1, 1], [], []>} : vector<8x512xbf16>, vector<512x64xbf16>, vector<8x64xf32> -> vector<8x64xf32>
    %c0_27 = arith.constant 0 : index
    %c0_28 = arith.constant 0 : index
    %92 = vector.load %arg8[%c0_27, %c0_28] : memref<1x64xf32, #tpu.memory_space<vmem>>, vector<1x64xf32>
    %93 = vector.broadcast %92 : vector<1x64xf32> to vector<8x64xf32>
    %94 = arith.addf %91, %93 : vector<8x64xf32>
    %cst_29 = arith.constant 0.000000e+00 : f32
    %95 = vector.broadcast %cst_29 : f32 to vector<8x64xf32>
    %96 = arith.cmpf oge, %94, %95 : vector<8x64xf32>
    %cst_30 = arith.constant 2.000000e-01 : f32
    %97 = vector.broadcast %cst_30 : f32 to vector<8x64xf32>
    %98 = arith.mulf %97, %94 : vector<8x64xf32>
    %99 = arith.select %96, %94, %98 : vector<8x64xi1>, vector<8x64xf32>
    %c0_31 = arith.constant 0 : index
    %c0_32 = arith.constant 0 : index
    %100 = vector.load %arg9[%c0_31, %c0_32] : memref<1x64xf32, #tpu.memory_space<vmem>>, vector<1x64xf32>
    %101 = vector.broadcast %100 : vector<1x64xf32> to vector<8x64xf32>
    %102 = arith.mulf %99, %101 : vector<8x64xf32>
    %cst_33 = arith.constant dense<0.000000e+00> : vector<8xf32>
    %103 = vector.multi_reduction <add>, %102, %cst_33 [1] : vector<8x64xf32> to vector<8xf32>
    %104 = vector.shape_cast %103 : vector<8xf32> to vector<8x1xf32>
    %c0_34 = arith.constant 0 : index
    %c0_35 = arith.constant 0 : index
    %105 = vector.load %arg10[%c0_34, %c0_35] : memref<1x1xf32, #tpu.memory_space<vmem>>, vector<1x1xf32>
    %106 = vector.broadcast %105 : vector<1x1xf32> to vector<8x1xf32>
    %107 = arith.addf %104, %106 : vector<8x1xf32>
    %108 = math.absf %107 : vector<8x1xf32>
    %cst_36 = arith.constant 0.000000e+00 : f32
    %109 = vector.broadcast %cst_36 : f32 to vector<8x1xf32>
    %110 = arith.subf %109, %108 : vector<8x1xf32>
    %111 = math.exp %110 : vector<8x1xf32>
    %cst_37 = arith.constant 1.000000e+00 : f32
    %112 = vector.broadcast %cst_37 : f32 to vector<8x1xf32>
    %113 = arith.addf %112, %111 : vector<8x1xf32>
    %114 = math.log %113 : vector<8x1xf32>
    %cst_38 = arith.constant 0.000000e+00 : f32
    %115 = vector.broadcast %cst_38 : f32 to vector<8x1xf32>
    %116 = arith.maximumf %107, %115 : vector<8x1xf32>
    %117 = arith.addf %116, %114 : vector<8x1xf32>
    %cst_39 = arith.constant 0.000000e+00 : f32
    %118 = vector.broadcast %cst_39 : f32 to vector<8x1xf32>
    %119 = arith.subf %118, %107 : vector<8x1xf32>
    %cst_40 = arith.constant 0.000000e+00 : f32
    %120 = vector.broadcast %cst_40 : f32 to vector<8x1xf32>
    %121 = arith.maximumf %119, %120 : vector<8x1xf32>
    %122 = arith.addf %121, %114 : vector<8x1xf32>
    %123 = vector.extract_strided_slice %122 {offsets = [0, 0], sizes = [2, 1], strides = [1, 1]} : vector<8x1xf32> to vector<2x1xf32>
    %124 = vector.shape_cast %123 : vector<2x1xf32> to vector<1x2x1xf32>
    %cst_41 = arith.constant dense<0.000000e+00> : vector<1xf32>
    %125 = vector.multi_reduction <add>, %124, %cst_41 [1, 2] : vector<1x2x1xf32> to vector<1xf32>
    %126 = vector.shape_cast %125 : vector<1xf32> to vector<1x1x1xf32>
    %127 = vector.extract %126[0, 0, 0] : f32 from vector<1x1x1xf32>
    %cst_42 = arith.constant 5.000000e-01 : f32
    %128 = arith.mulf %127, %cst_42 : f32
    %129 = vector.extract_strided_slice %122 {offsets = [2, 0], sizes = [2, 1], strides = [1, 1]} : vector<8x1xf32> to vector<2x1xf32>
    %130 = vector.shape_cast %129 : vector<2x1xf32> to vector<1x2x1xf32>
    %cst_43 = arith.constant dense<0.000000e+00> : vector<1xf32>
    %131 = vector.multi_reduction <add>, %130, %cst_43 [1, 2] : vector<1x2x1xf32> to vector<1xf32>
    %132 = vector.shape_cast %131 : vector<1xf32> to vector<1x1x1xf32>
    %133 = vector.extract %132[0, 0, 0] : f32 from vector<1x1x1xf32>
    %134 = vector.extract_strided_slice %117 {offsets = [0, 0], sizes = [2, 1], strides = [1, 1]} : vector<8x1xf32> to vector<2x1xf32>
    %135 = vector.shape_cast %134 : vector<2x1xf32> to vector<1x2x1xf32>
    %cst_44 = arith.constant dense<0.000000e+00> : vector<1xf32>
    %136 = vector.multi_reduction <add>, %135, %cst_44 [1, 2] : vector<1x2x1xf32> to vector<1xf32>
    %137 = vector.shape_cast %136 : vector<1xf32> to vector<1x1x1xf32>
    %138 = vector.extract %137[0, 0, 0] : f32 from vector<1x1x1xf32>
    %139 = arith.addf %133, %138 : f32
    %cst_45 = arith.constant 5.000000e-01 : f32
    %140 = arith.mulf %139, %cst_45 : f32
    %141 = tpu.iota {dimensions = array<i32: 1>} : vector<1x2xi32>
    %c0_i32 = arith.constant 0 : i32
    %142 = vector.broadcast %c0_i32 : i32 to vector<1x2xi32>
    %143 = arith.cmpi eq, %141, %142 : vector<1x2xi32>
    %144 = vector.broadcast %128 : f32 to vector<1x2xf32>
    %145 = vector.broadcast %140 : f32 to vector<1x2xf32>
    %146 = arith.select %143, %144, %145 : vector<1x2xi1>, vector<1x2xf32>
    %c0_46 = arith.constant 0 : index
    %c0_47 = arith.constant 0 : index
    %147 = vector.load %arg11[%c0_46, %c0_47] : memref<1x2xf32, #tpu.memory_space<vmem>>, vector<1x2xf32>
    tpu.vector_store %arg11[%c0_46, %c0_47], %146 {strides = array<i32>} : memref<1x2xf32, #tpu.memory_space<vmem>>, vector<1x2xf32>,
    return
  }
}

</mosaic_0001>

<llo_original>
// kernel: adversarial_forward.1
$region0: #{adversarial_forward.1}
  #allocation0 [shape = 'u32[]', space=smem, size = 0x4, offset = 0x4, fixed_abs, tag = 'smem constant byte address 0x4 - core index']
  #allocation1 [shape = 'u32[144,128]{1,0:T(1,128)}', space=vmem, size = 0x12000, scoped, tag = 'internal scratch']
  #allocation2 [shape = 'f32[1,1]{1,0:T(1,128)S(1)}', space=vmem, size = 0x200, scoped, tag = 'scoped memory for adversarial_forward.1']
  %s0 = inlined_call_operand.vmem [shape: f32[128,128], index: 0, kind: input, shape index: {}]
  %s1 = inlined_call_operand.vmem [shape: bf16[384,128], index: 1, kind: input, shape index: {}]
  %s2 = inlined_call_operand.vmem [shape: f32[1,128], index: 2, kind: input, shape index: {}]
  %s3 = inlined_call_operand.vmem [shape: bf16[384,128], index: 3, kind: input, shape index: {}]
  %s4 = inlined_call_operand.vmem [shape: f32[1,128], index: 4, kind: input, shape index: {}]
  %s5 = inlined_call_operand.vmem [shape: bf16[384,128], index: 5, kind: input, shape index: {}]
  %s6 = inlined_call_operand.vmem [shape: f32[1,128], index: 6, kind: input, shape index: {}]
  %s7 = inlined_call_operand.vmem [shape: bf16[512,64], index: 7, kind: input, shape index: {}]
  %s8 = inlined_call_operand.vmem [shape: f32[1,64], index: 8, kind: input, shape index: {}]
  %s9 = inlined_call_operand.vmem [shape: f32[1,64], index: 9, kind: input, shape index: {}]
  %s10 = inlined_call_operand.<no memory space> [shape: f32[1,1], index: 10, kind: input, shape index: {}]
  %s11 = inlined_call_operand.vmem [shape: f32[1,2], index: 11, kind: output, shape index: {}]
  %s12 = sld [smem:[#allocation0]]
  $region54: #{adversarial_forward.1} parent=0
    _
  %s14 = ssub.s32 1, %s12
  %s15 = scalar_select 0, %s14, %s12
  %v16 = vstv %s10
  %17 = vst [vmem:[#allocation2] sm:$0x1] %v16
  // Predicated region
  $region2: #{adversarial_forward.1} parent=0 // pred_check
    _
  $region3: #{adversarial_forward.1} parent=0 // pred_check_branch
    %19 = sbr.rel (0) target = $region5
  $region4: #{adversarial_forward.1} parent=0 // pred_region
    _
  $region5: #{adversarial_forward.1} parent=0 // pred_fallthru
    _
  // Predicated region
  $region6: #{adversarial_forward.1} parent=0 // pred_check
    _
  $region7: #{adversarial_forward.1} parent=0 // pred_check_branch
    %21 = sbr.rel (0) target = $region9
  $region8: #{adversarial_forward.1} parent=0 // pred_region
    _
  $region9: #{adversarial_forward.1} parent=0 // pred_fallthru
    _
  // Predicated region
  $region10: #{adversarial_forward.1} parent=0 // pred_check
    _
  $region11: #{adversarial_forward.1} parent=0 // pred_check_branch
    %23 = sbr.rel (0) target = $region13
  $region12: #{adversarial_forward.1} parent=0 // pred_region
    _
  $region13: #{adversarial_forward.1} parent=0 // pred_fallthru
    _
  // Predicated region
  $region14: #{adversarial_forward.1} parent=0 // pred_check
    _
  $region15: #{adversarial_forward.1} parent=0 // pred_check_branch
    %25 = sbr.rel (0) target = $region17
  $region16: #{adversarial_forward.1} parent=0 // pred_region
    _
  $region17: #{adversarial_forward.1} parent=0 // pred_fallthru
    _
  // Predicated region
  $region18: #{adversarial_forward.1} parent=0 // pred_check
    _
  $region19: #{adversarial_forward.1} parent=0 // pred_check_branch
    %27 = sbr.rel (0) target = $region21
  $region20: #{adversarial_forward.1} parent=0 // pred_region
    _
  $region21: #{adversarial_forward.1} parent=0 // pred_fallthru
    _
  // Predicated region
  $region22: #{adversarial_forward.1} parent=0 // pred_check
    _
  $region23: #{adversarial_forward.1} parent=0 // pred_check_branch
    %29 = sbr.rel (0) target = $region25
  $region24: #{adversarial_forward.1} parent=0 // pred_region
    _
  $region25: #{adversarial_forward.1} parent=0 // pred_fallthru
    _
  // Predicated region
  $region26: #{adversarial_forward.1} parent=0 // pred_check
    _
  $region27: #{adversarial_forward.1} parent=0 // pred_check_branch
    %31 = sbr.rel (0) target = $region29
  $region28: #{adversarial_forward.1} parent=0 // pred_region
    _
  $region29: #{adversarial_forward.1} parent=0 // pred_fallthru
    _
  // Predicated region
  $region30: #{adversarial_forward.1} parent=0 // pred_check
    _
  $region31: #{adversarial_forward.1} parent=0 // pred_check_branch
    %33 = sbr.rel (0) target = $region33
  $region32: #{adversarial_forward.1} parent=0 // pred_region
    _
  $region33: #{adversarial_forward.1} parent=0 // pred_fallthru
    _
  // Predicated region
  $region34: #{adversarial_forward.1} parent=0 // pred_check
    _
  $region35: #{adversarial_forward.1} parent=0 // pred_check_branch
    %35 = sbr.rel (0) target = $region37
  $region36: #{adversarial_forward.1} parent=0 // pred_region
    _
  $region37: #{adversarial_forward.1} parent=0 // pred_fallthru
    _
  // Predicated region
  $region38: #{adversarial_forward.1} parent=0 // pred_check
    _
  $region39: #{adversarial_forward.1} parent=0 // pred_check_branch
    %37 = sbr.rel (0) target = $region41
  $region40: #{adversarial_forward.1} parent=0 // pred_region
    _
  $region41: #{adversarial_forward.1} parent=0 // pred_fallthru
    _
  // Predicated region
  $region42: #{adversarial_forward.1} parent=0 // pred_check
    _
  $region43: #{adversarial_forward.1} parent=0 // pred_check_branch
    %39 = sbr.rel (0) target = $region45
  $region44: #{adversarial_forward.1} parent=0 // pred_region
    _
  $region45: #{adversarial_forward.1} parent=0 // pred_fallthru
    _
  %v41 = vld [vmem:[%s0] sm:$0xff]
  %v42 = vld [vmem:[%s0 + $0x8] sm:$0xff]
  %v43 = vld [vmem:[%s0 + $0x10] sm:$0xff]
  %v44 = vld [vmem:[%s0 + $0x18] sm:$0xff]
  %v45 = vld [vmem:[%s0 + $0x20] sm:$0xff]
  %v46 = vld [vmem:[%s0 + $0x28] sm:$0xff]
  %v47 = vld [vmem:[%s0 + $0x30] sm:$0xff]
  %v48 = vld [vmem:[%s0 + $0x38] sm:$0xff]
  %v49 = vld [vmem:[%s0 + $0x40] sm:$0xff]
  %v50 = vld [vmem:[%s0 + $0x48] sm:$0xff]
  %v51 = vld [vmem:[%s0 + $0x50] sm:$0xff]
  %v52 = vld [vmem:[%s0 + $0x58] sm:$0xff]
  %v53 = vld [vmem:[%s0 + $0x60] sm:$0xff]
  %v54 = vld [vmem:[%s0 + $0x68] sm:$0xff]
  %v55 = vld [vmem:[%s0 + $0x70] sm:$0xff]
  %v56 = vld [vmem:[%s0 + $0x78] sm:$0xff]
  %v57 = vpack.c.bf16 %v41, 0.0
  %v58 = vpack.c.bf16 %v42, %v41
  %v59 = vpack.c.bf16 %v43, %v42
  %v60 = vpack.c.bf16 %v44, %v43
  %v61 = vpack.c.bf16 %v45, %v44
  %v62 = vpack.c.bf16 %v46, %v45
  %v63 = vpack.c.bf16 %v47, %v46
  %v64 = vpack.c.bf16 %v48, %v47
  %v65 = vpack.c.bf16 %v49, %v48
  %v66 = vpack.c.bf16 %v50, %v49
  %v67 = vpack.c.bf16 %v51, %v50
  %v68 = vpack.c.bf16 %v52, %v51
  %v69 = vpack.c.bf16 %v53, %v52
  %v70 = vpack.c.bf16 %v54, %v53
  %v71 = vpack.c.bf16 %v55, %v54
  %v72 = vpack.c.bf16 %v56, %v55
  %v73 = vpack.c.bf16 0.0, %v56
  %v74 = vld [vmem:[%s1] sm:$0xf]
  %v75 = vld [vmem:[%s1 + $0x4] sm:$0xf]
  %v76 = vld [vmem:[%s1 + $0x8] sm:$0xf]
  %v77 = vld [vmem:[%s1 + $0xc] sm:$0xf]
  %v78 = vld [vmem:[%s1 + $0x10] sm:$0xf]
  %v79 = vld [vmem:[%s1 + $0x14] sm:$0xf]
  %v80 = vld [vmem:[%s1 + $0x18] sm:$0xf]
  %v81 = vld [vmem:[%s1 + $0x1c] sm:$0xf]
  %v82 = vld [vmem:[%s1 + $0x20] sm:$0xf]
  %v83 = vld [vmem:[%s1 + $0x24] sm:$0xf]
  %v84 = vld [vmem:[%s1 + $0x28] sm:$0xf]
  %v85 = vld [vmem:[%s1 + $0x2c] sm:$0xf]
  %v86 = vld [vmem:[%s1 + $0x30] sm:$0xf]
  %v87 = vld [vmem:[%s1 + $0x34] sm:$0xf]
  %v88 = vld [vmem:[%s1 + $0x38] sm:$0xf]
  %v89 = vld [vmem:[%s1 + $0x3c] sm:$0xf]
  %v90 = vld [vmem:[%s1 + $0x40] sm:$0xf]
  %v91 = vld [vmem:[%s1 + $0x44] sm:$0xf]
  %v92 = vld [vmem:[%s1 + $0x48] sm:$0xf]
  %v93 = vld [vmem:[%s1 + $0x4c] sm:$0xf]
  %v94 = vld [vmem:[%s1 + $0x50] sm:$0xf]
  %v95 = vld [vmem:[%s1 + $0x54] sm:$0xf]
  %v96 = vld [vmem:[%s1 + $0x58] sm:$0xf]
  %v97 = vld [vmem:[%s1 + $0x5c] sm:$0xf]
  %v98 = vld [vmem:[%s1 + $0x60] sm:$0xf]
  %v99 = vld [vmem:[%s1 + $0x64] sm:$0xf]
  %v100 = vld [vmem:[%s1 + $0x68] sm:$0xf]
  %v101 = vld [vmem:[%s1 + $0x6c] sm:$0xf]
  %v102 = vld [vmem:[%s1 + $0x70] sm:$0xf]
  %v103 = vld [vmem:[%s1 + $0x74] sm:$0xf]
  %v104 = vld [vmem:[%s1 + $0x78] sm:$0xf]
  %v105 = vld [vmem:[%s1 + $0x7c] sm:$0xf]
  %v106 = vld [vmem:[%s1 + $0x80] sm:$0xf]
  %v107 = vld [vmem:[%s1 + $0x84] sm:$0xf]
  %v108 = vld [vmem:[%s1 + $0x88] sm:$0xf]
  %v109 = vld [vmem:[%s1 + $0x8c] sm:$0xf]
  %v110 = vld [vmem:[%s1 + $0x90] sm:$0xf]
  %v111 = vld [vmem:[%s1 + $0x94] sm:$0xf]
  %v112 = vld [vmem:[%s1 + $0x98] sm:$0xf]
  %v113 = vld [vmem:[%s1 + $0x9c] sm:$0xf]
  %v114 = vld [vmem:[%s1 + $0xa0] sm:$0xf]
  %v115 = vld [vmem:[%s1 + $0xa4] sm:$0xf]
  %v116 = vld [vmem:[%s1 + $0xa8] sm:$0xf]
  %v117 = vld [vmem:[%s1 + $0xac] sm:$0xf]
  %v118 = vld [vmem:[%s1 + $0xb0] sm:$0xf]
  %v119 = vld [vmem:[%s1 + $0xb4] sm:$0xf]
  %v120 = vld [vmem:[%s1 + $0xb8] sm:$0xf]
  %v121 = vld [vmem:[%s1 + $0xbc] sm:$0xf]
  %v122 = vld [vmem:[%s2] sm:$0x1]
  %v124 = vlaneseq
  %v125 = vshrl.u32 %v124, 7
  %v126 = vsub.s32 0, %v125
  %v127 = vrot.slane %v122, %v126
  %v177 = vunpack.c.l.b16 %v74
  %v178 = vunpack.c.l.b16 %v75
  %v179 = vunpack.c.l.b16 %v76
  %v180 = vunpack.c.l.b16 %v77
  %v181 = vunpack.c.l.b16 %v78
  %v182 = vunpack.c.l.b16 %v79
  %v183 = vunpack.c.l.b16 %v80
  %v184 = vunpack.c.l.b16 %v81
  %v185 = vunpack.c.l.b16 %v82
  %v186 = vunpack.c.l.b16 %v83
  %v187 = vunpack.c.l.b16 %v84
  %v188 = vunpack.c.l.b16 %v85
  %v189 = vunpack.c.l.b16 %v86
  %v190 = vunpack.c.l.b16 %v87
  %v191 = vunpack.c.l.b16 %v88
  %v192 = vunpack.c.l.b16 %v89
  %v193 = vunpack.c.l.b16 %v90
  %v194 = vunpack.c.l.b16 %v91
  %v195 = vunpack.c.l.b16 %v92
  %v196 = vunpack.c.l.b16 %v93
  %v197 = vunpack.c.l.b16 %v94
  %v198 = vunpack.c.l.b16 %v95
  %v199 = vunpack.c.l.b16 %v96
  %v200 = vunpack.c.l.b16 %v97
  %v201 = vunpack.c.l.b16 %v98
  %v202 = vunpack.c.l.b16 %v99
  %v203 = vunpack.c.l.b16 %v100
  %v204 = vunpack.c.l.b16 %v101
  %v205 = vunpack.c.l.b16 %v102
  %v206 = vunpack.c.l.b16 %v103
  %v207 = vunpack.c.l.b16 %v104
  %v208 = vunpack.c.l.b16 %v105
  %v209 = vunpack.c.l.b16 %v106
  %v210 = vunpack.c.l.b16 %v107
  %v211 = vunpack.c.l.b16 %v108
  %v212 = vunpack.c.l.b16 %v109
  %v213 = vunpack.c.l.b16 %v110
  %v214 = vunpack.c.l.b16 %v111
  %v215 = vunpack.c.l.b16 %v112
  %v216 = vunpack.c.l.b16 %v113
  %v217 = vunpack.c.l.b16 %v114
  %v218 = vunpack.c.l.b16 %v115
  %v219 = vunpack.c.l.b16 %v116
  %v220 = vunpack.c.l.b16 %v117
  %v221 = vunpack.c.l.b16 %v118
  %v222 = vunpack.c.l.b16 %v119
  %v223 = vunpack.c.l.b16 %v120
  %v224 = vunpack.c.l.b16 %v121
  %v225 = vpack.c.b16 %v178, %v177
  %v226 = vpack.c.b16 %v180, %v179
  %v227 = vpack.c.b16 %v182, %v181
  %v228 = vpack.c.b16 %v184, %v183
  %v229 = vpack.c.b16 %v186, %v185
  %v230 = vpack.c.b16 %v188, %v187
  %v231 = vpack.c.b16 %v190, %v189
  %v232 = vpack.c.b16 %v192, %v191
  %v233 = vpack.c.b16 %v194, %v193
  %v234 = vpack.c.b16 %v196, %v195
  %v235 = vpack.c.b16 %v198, %v197
  %v236 = vpack.c.b16 %v200, %v199
  %v237 = vpack.c.b16 %v202, %v201
  %v238 = vpack.c.b16 %v204, %v203
  %v239 = vpack.c.b16 %v206, %v205
  %v240 = vpack.c.b16 %v208, %v207
  %v241 = vpack.c.b16 %v210, %v209
  %v242 = vpack.c.b16 %v212, %v211
  %v243 = vpack.c.b16 %v214, %v213
  %v244 = vpack.c.b16 %v216, %v215
  %v245 = vpack.c.b16 %v218, %v217
  %v246 = vpack.c.b16 %v220, %v219
  %v247 = vpack.c.b16 %v222, %v221
  %v248 = vpack.c.b16 %v224, %v223
  %273 = vmatprep.subr.bf16.mxu0 0
  %274 = vmatpush1.bf16.msra.mxu0 %v225
  %275 = vmatprep.subr.bf16.mxu0 0
  %276 = vmatpush1.bf16.msra.mxu0 %v226
  %277 = vmatprep.subr.bf16.mxu0 0
  %278 = vmatpush1.bf16.msra.mxu0 %v227
  %279 = vmatprep.subr.bf16.mxu0 0
  %280 = vmatpush1.bf16.msra.mxu0 %v228
  %281 = vmatprep.subr.bf16.mxu0 0
  %282 = vmatpush1.bf16.msra.mxu0 %v229
  %283 = vmatprep.subr.bf16.mxu0 0
  %284 = vmatpush1.bf16.msra.mxu0 %v230
  %285 = vmatprep.subr.bf16.mxu0 0
  %286 = vmatpush1.bf16.msra.mxu0 %v231
  %287 = vmatprep.subr.bf16.mxu0 0
  %288 = vmatpush1.bf16.msra.mxu0 %v232
  %289 = vmatprep.subr.bf16.mxu0 0
  %290 = vmatpush1.bf16.msra.mxu0 %v233
  %291 = vmatprep.subr.bf16.mxu0 0
  %292 = vmatpush1.bf16.msra.mxu0 %v234
  %293 = vmatprep.subr.bf16.mxu0 0
  %294 = vmatpush1.bf16.msra.mxu0 %v235
  %295 = vmatprep.subr.bf16.mxu0 0
  %296 = vmatpush1.bf16.msra.mxu0 %v236
  %297 = vmatprep.subr.bf16.mxu0 0
  %298 = vmatpush1.bf16.msra.mxu0 %v237
  %299 = vmatprep.subr.bf16.mxu0 0
  %300 = vmatpush1.bf16.msra.mxu0 %v238
  %301 = vmatprep.subr.bf16.mxu0 0
  %302 = vmatpush1.bf16.msra.mxu0 %v239
  %303 = vmatprep.subr.bf16.mxu0 0
  %304 = vmatpush1.bf16.msra.mxu0 %v240
  %305 = vmatprep.mubr.bf16.mxu0 %v58
  %306 = vmatmul.mubr.bf16.gmra.mrb[0].mxu0 %v57
  %v307 = vpop.f32.mrb[0].mxu0
  %v308 = vadd.f32 %v127, %v307
  %v309 = vpop.f32.mrb[0].mxu0
  %v310 = vpop.f32.mrb[0].mxu0
  %v311 = vadd.f32 %v127, %v310
  %v312 = vpop.f32.mrb[0].mxu0
  %313 = vmatprep.mubr.bf16.mxu0 %v60
  %314 = vmatmul.mubr.bf16.gmra.mrb[0].mxu0 %v59
  %v315 = vpop.f32.mrb[0].mxu0
  %v316 = vadd.f32 %v127, %v315
  %v317 = vpop.f32.mrb[0].mxu0
  %v318 = vpop.f32.mrb[0].mxu0
  %v319 = vadd.f32 %v127, %v318
  %v320 = vpop.f32.mrb[0].mxu0
  %321 = vmatprep.mubr.bf16.mxu0 %v62
  %322 = vmatmul.mubr.bf16.gmra.mrb[0].mxu0 %v61
  %v323 = vpop.f32.mrb[0].mxu0
  %v324 = vadd.f32 %v127, %v323
  %v325 = vpop.f32.mrb[0].mxu0
  %v326 = vpop.f32.mrb[0].mxu0
  %v327 = vadd.f32 %v127, %v326
  %v328 = vpop.f32.mrb[0].mxu0
  %329 = vmatprep.mubr.bf16.mxu0 %v64
  %330 = vmatmul.mubr.bf16.gmra.mrb[0].mxu0 %v63
  %v331 = vpop.f32.mrb[0].mxu0
  %v332 = vadd.f32 %v127, %v331
  %v333 = vpop.f32.mrb[0].mxu0
  %v334 = vpop.f32.mrb[0].mxu0
  %v335 = vadd.f32 %v127, %v334
  %v336 = vpop.f32.mrb[0].mxu0
  %337 = vmatprep.mubr.bf16.mxu0 %v66
  %338 = vmatmul.mubr.bf16.gmra.mrb[0].mxu0 %v65
  %v339 = vpop.f32.mrb[0].mxu0
  %v340 = vadd.f32 %v127, %v339
  %v341 = vpop.f32.mrb[0].mxu0
  %v342 = vpop.f32.mrb[0].mxu0
  %v343 = vadd.f32 %v127, %v342
  %v344 = vpop.f32.mrb[0].mxu0
  %345 = vmatprep.mubr.bf16.mxu0 %v68
  %346 = vmatmul.mubr.bf16.gmra.mrb[0].mxu0 %v67
  %v347 = vpop.f32.mrb[0].mxu0
  %v348 = vadd.f32 %v127, %v347
  %v349 = vpop.f32.mrb[0].mxu0
  %v350 = vpop.f32.mrb[0].mxu0
  %v351 = vadd.f32 %v127, %v350
  %v352 = vpop.f32.mrb[0].mxu0
  %353 = vmatprep.mubr.bf16.mxu0 %v70
  %354 = vmatmul.mubr.bf16.gmra.mrb[0].mxu0 %v69
  %v355 = vpop.f32.mrb[0].mxu0
  %v356 = vadd.f32 %v127, %v355
  %v357 = vpop.f32.mrb[0].mxu0
  %v358 = vpop.f32.mrb[0].mxu0
  %v359 = vadd.f32 %v127, %v358
  %v360 = vpop.f32.mrb[0].mxu0
  %361 = vmatprep.mubr.bf16.mxu0 %v72
  %362 = vmatmul.mubr.bf16.gmra.mrb[0].mxu0 %v71
  %v363 = vpop.f32.mrb[0].mxu0
  %v364 = vadd.f32 %v127, %v363
  %v365 = vpop.f32.mrb[0].mxu0
  %v366 = vpop.f32.mrb[0].mxu0
  %v367 = vadd.f32 %v127, %v366
  %v368 = vpop.f32.mrb[0].mxu0
  %369 = vdwg.mxu0
  %370 = vmatprep.subr.bf16.mxu0 0
  %371 = vmatpush1.bf16.msra.mxu0 %v241
  %372 = vmatprep.subr.bf16.mxu0 0
  %373 = vmatpush1.bf16.msra.mxu0 %v242
  %374 = vmatprep.subr.bf16.mxu0 0
  %375 = vmatpush1.bf16.msra.mxu0 %v243
  %376 = vmatprep.subr.bf16.mxu0 0
  %377 = vmatpush1.bf16.msra.mxu0 %v244
  %378 = vmatprep.subr.bf16.mxu0 0
  %379 = vmatpush1.bf16.msra.mxu0 %v245
  %380 = vmatprep.subr.bf16.mxu0 0
  %381 = vmatpush1.bf16.msra.mxu0 %v246
  %382 = vmatprep.subr.bf16.mxu0 0
  %383 = vmatpush1.bf16.msra.mxu0 %v247
  %384 = vmatprep.subr.bf16.mxu0 0
  %385 = vmatpush1.bf16.msra.mxu0 %v248
  %386 = vmatprep.subr.bf16.mxu0 0
  %387 = vmatpush1.bf16.msra.mxu0 0
  %388 = vmatprep.subr.bf16.mxu0 0
  %389 = vmatpush1.bf16.msra.mxu0 0
  %390 = vmatprep.subr.bf16.mxu0 0
  %391 = vmatpush1.bf16.msra.mxu0 0
  %392 = vmatprep.subr.bf16.mxu0 0
  %393 = vmatpush1.bf16.msra.mxu0 0
  %394 = vmatprep.subr.bf16.mxu0 0
  %395 = vmatpush1.bf16.msra.mxu0 0
  %396 = vmatprep.subr.bf16.mxu0 0
  %397 = vmatpush1.bf16.msra.mxu0 0
  %398 = vmatprep.subr.bf16.mxu0 0
  %399 = vmatpush1.bf16.msra.mxu0 0
  %400 = vmatprep.subr.bf16.mxu0 0
  %401 = vmatpush1.bf16.msra.mxu0 0
  %402 = vmatprep.mubr.bf16.mxu0 0
  %403 = vmatmul.mubr.bf16.gmra.mrb[0].mxu0 %v59
  %v404 = vpop.f32.mrb[0].mxu0
  %v405 = vadd.f32 %v308, %v404
  %v406 = vpop.f32.mrb[0].mxu0
  %v407 = vpop.f32.mrb[0].mxu0
  %v408 = vadd.f32 %v311, %v407
  %v409 = vpop.f32.mrb[0].mxu0
  %410 = vmatprep.mubr.bf16.mxu0 0
  %411 = vmatmul.mubr.bf16.gmra.mrb[0].mxu0 %v61
  %v412 = vpop.f32.mrb[0].mxu0
  %v413 = vadd.f32 %v316, %v412
  %v414 = vpop.f32.mrb[0].mxu0
  %v415 = vpop.f32.mrb[0].mxu0
  %v416 = vadd.f32 %v319, %v415
  %v417 = vpop.f32.mrb[0].mxu0
  %418 = vmatprep.mubr.bf16.mxu0 0
  %419 = vmatmul.mubr.bf16.gmra.mrb[0].mxu0 %v63
  %v420 = vpop.f32.mrb[0].mxu0
  %v421 = vadd.f32 %v324, %v420
  %v422 = vpop.f32.mrb[0].mxu0
  %v423 = vpop.f32.mrb[0].mxu0
  %v424 = vadd.f32 %v327, %v423
  %v425 = vpop.f32.mrb[0].mxu0
  %426 = vmatprep.mubr.bf16.mxu0 0
  %427 = vmatmul.mubr.bf16.gmra.mrb[0].mxu0 %v65
  %v428 = vpop.f32.mrb[0].mxu0
  %v429 = vadd.f32 %v332, %v428
  %v430 = vpop.f32.mrb[0].mxu0
  %v431 = vpop.f32.mrb[0].mxu0
  %v432 = vadd.f32 %v335, %v431
  %v433 = vpop.f32.mrb[0].mxu0
  %434 = vmatprep.mubr.bf16.mxu0 0
  %435 = vmatmul.mubr.bf16.gmra.mrb[0].mxu0 %v67
  %v436 = vpop.f32.mrb[0].mxu0
  %v437 = vadd.f32 %v340, %v436
  %v438 = vpop.f32.mrb[0].mxu0
  %v439 = vpop.f32.mrb[0].mxu0
  %v440 = vadd.f32 %v343, %v439
  %v441 = vpop.f32.mrb[0].mxu0
  %442 = vmatprep.mubr.bf16.mxu0 0
  %443 = vmatmul.mubr.bf16.gmra.mrb[0].mxu0 %v69
  %v444 = vpop.f32.mrb[0].mxu0
  %v445 = vadd.f32 %v348, %v444
  %v446 = vpop.f32.mrb[0].mxu0
  %v447 = vpop.f32.mrb[0].mxu0
  %v448 = vadd.f32 %v351, %v447
  %v449 = vpop.f32.mrb[0].mxu0
  %450 = vmatprep.mubr.bf16.mxu0 0
  %451 = vmatmul.mubr.bf16.gmra.mrb[0].mxu0 %v71
  %v452 = vpop.f32.mrb[0].mxu0
  %v453 = vadd.f32 %v356, %v452
  %v454 = vpop.f32.mrb[0].mxu0
  %v455 = vpop.f32.mrb[0].mxu0
  %v456 = vadd.f32 %v359, %v455
  %v457 = vpop.f32.mrb[0].mxu0
  %458 = vmatprep.mubr.bf16.mxu0 0
  %459 = vmatmul.mubr.bf16.gmra.mrb[0].mxu0 %v73
  %v460 = vpop.f32.mrb[0].mxu0
  %v461 = vadd.f32 %v364, %v460
  %v462 = vpop.f32.mrb[0].mxu0
  %v463 = vpop.f32.mrb[0].mxu0
  %v464 = vadd.f32 %v367, %v463
  %v465 = vpop.f32.mrb[0].mxu0
  %466 = vdwg.mxu0
  %vm467 = vcmp.ge.f32.partialorder %v405, 0.0
  %vm468 = vcmp.ge.f32.partialorder %v408, 0.0
  %vm469 = vcmp.ge.f32.partialorder %v413, 0.0
  %vm470 = vcmp.ge.f32.partialorder %v416, 0.0
  %vm471 = vcmp.ge.f32.partialorder %v421, 0.0
  %vm472 = vcmp.ge.f32.partialorder %v424, 0.0
  %vm473 = vcmp.ge.f32.partialorder %v429, 0.0
  %vm474 = vcmp.ge.f32.partialorder %v432, 0.0
  %vm475 = vcmp.ge.f32.partialorder %v437, 0.0
  %vm476 = vcmp.ge.f32.partialorder %v440, 0.0
  %vm477 = vcmp.ge.f32.partialorder %v445, 0.0
  %vm478 = vcmp.ge.f32.partialorder %v448, 0.0
  %vm479 = vcmp.ge.f32.partialorder %v453, 0.0
  %vm480 = vcmp.ge.f32.partialorder %v456, 0.0
  %vm481 = vcmp.ge.f32.partialorder %v461, 0.0
  %vm482 = vcmp.ge.f32.partialorder %v464, 0.0
  %v483 = vmul.f32 %v405, 0.2
  %v484 = vmul.f32 %v408, 0.2
  %v485 = vmul.f32 %v413, 0.2
  %v486 = vmul.f32 %v416, 0.2
  %v487 = vmul.f32 %v421, 0.2
  %v488 = vmul.f32 %v424, 0.2
  %v489 = vmul.f32 %v429, 0.2
  %v490 = vmul.f32 %v432, 0.2
  %v491 = vmul.f32 %v437, 0.2
  %v492 = vmul.f32 %v440, 0.2
  %v493 = vmul.f32 %v445, 0.2
  %v494 = vmul.f32 %v448, 0.2
  %v495 = vmul.f32 %v453, 0.2
  %v496 = vmul.f32 %v456, 0.2
  %v497 = vmul.f32 %v461, 0.2
  %v498 = vmul.f32 %v464, 0.2
  %v499 = vsel %vm467, %v405, %v483
  %v500 = vsel %vm468, %v408, %v484
  %v501 = vsel %vm469, %v413, %v485
  %v502 = vsel %vm470, %v416, %v486
  %v503 = vsel %vm471, %v421, %v487
  %v504 = vsel %vm472, %v424, %v488
  %v505 = vsel %vm473, %v429, %v489
  %v506 = vsel %vm474, %v432, %v490
  %v507 = vsel %vm475, %v437, %v491
  %v508 = vsel %vm476, %v440, %v492
  %v509 = vsel %vm477, %v445, %v493
  %v510 = vsel %vm478, %v448, %v494
  %v511 = vsel %vm479, %v453, %v495
  %v512 = vsel %vm480, %v456, %v496
  %v513 = vsel %vm481, %v461, %v497
  %v514 = vsel %vm482, %v464, %v498
  %v515 = vpack.c.bf16 %v500, 0.0
  %v516 = vpack.c.bf16 %v501, %v499
  %v517 = vpack.c.bf16 %v502, %v500
  %v518 = vpack.c.bf16 %v504, %v502
  %v519 = vpack.c.bf16 %v505, %v503
  %v520 = vpack.c.bf16 %v506, %v504
  %v521 = vpack.c.bf16 %v508, %v506
  %v522 = vpack.c.bf16 %v509, %v507
  %v523 = vpack.c.bf16 %v510, %v508
  %v524 = vpack.c.bf16 %v512, %v510
  %v525 = vpack.c.bf16 %v513, %v511
  %v526 = vpack.c.bf16 %v514, %v512
  %v527 = vld [vmem:[%s3] sm:$0xf]
  %v528 = vld [vmem:[%s3 + $0x4] sm:$0xf]
  %v529 = vld [vmem:[%s3 + $0x8] sm:$0xf]
  %v530 = vld [vmem:[%s3 + $0xc] sm:$0xf]
  %v531 = vld [vmem:[%s3 + $0x10] sm:$0xf]
  %v532 = vld [vmem:[%s3 + $0x14] sm:$0xf]
  %v533 = vld [vmem:[%s3 + $0x18] sm:$0xf]
  %v534 = vld [vmem:[%s3 + $0x1c] sm:$0xf]
  %v535 = vld [vmem:[%s3 + $0x20] sm:$0xf]
  %v536 = vld [vmem:[%s3 + $0x24] sm:$0xf]
  %v537 = vld [vmem:[%s3 + $0x28] sm:$0xf]
  %v538 = vld [vmem:[%s3 + $0x2c] sm:$0xf]
  %v539 = vld [vmem:[%s3 + $0x30] sm:$0xf]
  %v540 = vld [vmem:[%s3 + $0x34] sm:$0xf]
  %v541 = vld [vmem:[%s3 + $0x38] sm:$0xf]
  %v542 = vld [vmem:[%s3 + $0x3c] sm:$0xf]
  %v543 = vld [vmem:[%s3 + $0x40] sm:$0xf]
  %v544 = vld [vmem:[%s3 + $0x44] sm:$0xf]
  %v545 = vld [vmem:[%s3 + $0x48] sm:$0xf]
  %v546 = vld [vmem:[%s3 + $0x4c] sm:$0xf]
  %v547 = vld [vmem:[%s3 + $0x50] sm:$0xf]
  %v548 = vld [vmem:[%s3 + $0x54] sm:$0xf]
  %v549 = vld [vmem:[%s3 + $0x58] sm:$0xf]
  %v550 = vld [vmem:[%s3 + $0x5c] sm:$0xf]
  %v551 = vld [vmem:[%s3 + $0x60] sm:$0xf]
  %v552 = vld [vmem:[%s3 + $0x64] sm:$0xf]
  %v553 = vld [vmem:[%s3 + $0x68] sm:$0xf]
  %v554 = vld [vmem:[%s3 + $0x6c] sm:$0xf]
  %v555 = vld [vmem:[%s3 + $0x70] sm:$0xf]
  %v556 = vld [vmem:[%s3 + $0x74] sm:$0xf]
  %v557 = vld [vmem:[%s3 + $0x78] sm:$0xf]
  %v558 = vld [vmem:[%s3 + $0x7c] sm:$0xf]
  %v559 = vld [vmem:[%s3 + $0x80] sm:$0xf]
  %v560 = vld [vmem:[%s3 + $0x84] sm:$0xf]
  %v561 = vld [vmem:[%s3 + $0x88] sm:$0xf]
  %v562 = vld [vmem:[%s3 + $0x8c] sm:$0xf]
  %v563 = vld [vmem:[%s3 + $0x90] sm:$0xf]
  %v564 = vld [vmem:[%s3 + $0x94] sm:$0xf]
  %v565 = vld [vmem:[%s3 + $0x98] sm:$0xf]
  %v566 = vld [vmem:[%s3 + $0x9c] sm:$0xf]
  %v567 = vld [vmem:[%s3 + $0xa0] sm:$0xf]
  %v568 = vld [vmem:[%s3 + $0xa4] sm:$0xf]
  %v569 = vld [vmem:[%s3 + $0xa8] sm:$0xf]
  %v570 = vld [vmem:[%s3 + $0xac] sm:$0xf]
  %v571 = vld [vmem:[%s3 + $0xb0] sm:$0xf]
  %v572 = vld [vmem:[%s3 + $0xb4] sm:$0xf]
  %v573 = vld [vmem:[%s3 + $0xb8] sm:$0xf]
  %v574 = vld [vmem:[%s3 + $0xbc] sm:$0xf]
  %v575 = vld [vmem:[%s4] sm:$0x1]
  %v577 = vlaneseq
  %v578 = vshrl.u32 %v577, 7
  %v579 = vsub.s32 0, %v578
  %v580 = vrot.slane %v575, %v579
  %v630 = vunpack.c.l.b16 %v527
  %v631 = vunpack.c.l.b16 %v528
  %v632 = vunpack.c.l.b16 %v529
  %v633 = vunpack.c.l.b16 %v530
  %v634 = vunpack.c.l.b16 %v531
  %v635 = vunpack.c.l.b16 %v532
  %v636 = vunpack.c.l.b16 %v533
  %v637 = vunpack.c.l.b16 %v534
  %v638 = vunpack.c.l.b16 %v535
  %v639 = vunpack.c.l.b16 %v536
  %v640 = vunpack.c.l.b16 %v537
  %v641 = vunpack.c.l.b16 %v538
  %v642 = vunpack.c.l.b16 %v539
  %v643 = vunpack.c.l.b16 %v540
  %v644 = vunpack.c.l.b16 %v541
  %v645 = vunpack.c.l.b16 %v542
  %v646 = vunpack.c.l.b16 %v543
  %v647 = vunpack.c.l.b16 %v544
  %v648 = vunpack.c.l.b16 %v545
  %v649 = vunpack.c.l.b16 %v546
  %v650 = vunpack.c.l.b16 %v547
  %v651 = vunpack.c.l.b16 %v548
  %v652 = vunpack.c.l.b16 %v549
  %v653 = vunpack.c.l.b16 %v550
  %v654 = vunpack.c.l.b16 %v551
  %v655 = vunpack.c.l.b16 %v552
  %v656 = vunpack.c.l.b16 %v553
  %v657 = vunpack.c.l.b16 %v554
  %v658 = vunpack.c.l.b16 %v555
  %v659 = vunpack.c.l.b16 %v556
  %v660 = vunpack.c.l.b16 %v557
  %v661 = vunpack.c.l.b16 %v558
  %v662 = vunpack.c.l.b16 %v559
  %v663 = vunpack.c.l.b16 %v560
  %v664 = vunpack.c.l.b16 %v561
  %v665 = vunpack.c.l.b16 %v562
  %v666 = vunpack.c.l.b16 %v563
  %v667 = vunpack.c.l.b16 %v564
  %v668 = vunpack.c.l.b16 %v565
  %v669 = vunpack.c.l.b16 %v566
  %v670 = vunpack.c.l.b16 %v567
  %v671 = vunpack.c.l.b16 %v568
  %v672 = vunpack.c.l.b16 %v569
  %v673 = vunpack.c.l.b16 %v570
  %v674 = vunpack.c.l.b16 %v571
  %v675 = vunpack.c.l.b16 %v572
  %v676 = vunpack.c.l.b16 %v573
  %v677 = vunpack.c.l.b16 %v574
  %v678 = vpack.c.b16 %v631, %v630
  %v679 = vpack.c.b16 %v633, %v632
  %v680 = vpack.c.b16 %v635, %v634
  %v681 = vpack.c.b16 %v637, %v636
  %v682 = vpack.c.b16 %v639, %v638
  %v683 = vpack.c.b16 %v641, %v640
  %v684 = vpack.c.b16 %v643, %v642
  %v685 = vpack.c.b16 %v645, %v644
  %v686 = vpack.c.b16 %v647, %v646
  %v687 = vpack.c.b16 %v649, %v648
  %v688 = vpack.c.b16 %v651, %v650
  %v689 = vpack.c.b16 %v653, %v652
  %v690 = vpack.c.b16 %v655, %v654
  %v691 = vpack.c.b16 %v657, %v656
  %v692 = vpack.c.b16 %v659, %v658
  %v693 = vpack.c.b16 %v661, %v660
  %v694 = vpack.c.b16 %v663, %v662
  %v695 = vpack.c.b16 %v665, %v664
  %v696 = vpack.c.b16 %v667, %v666
  %v697 = vpack.c.b16 %v669, %v668
  %v698 = vpack.c.b16 %v671, %v670
  %v699 = vpack.c.b16 %v673, %v672
  %v700 = vpack.c.b16 %v675, %v674
  %v701 = vpack.c.b16 %v677, %v676
  %726 = vmatprep.subr.bf16.mxu0 0
  %727 = vmatpush1.bf16.msra.mxu0 %v678
  %728 = vmatprep.subr.bf16.mxu0 0
  %729 = vmatpush1.bf16.msra.mxu0 %v679
  %730 = vmatprep.subr.bf16.mxu0 0
  %731 = vmatpush1.bf16.msra.mxu0 %v680
  %732 = vmatprep.subr.bf16.mxu0 0
  %733 = vmatpush1.bf16.msra.mxu0 %v681
  %734 = vmatprep.subr.bf16.mxu0 0
  %735 = vmatpush1.bf16.msra.mxu0 %v682
  %736 = vmatprep.subr.bf16.mxu0 0
  %737 = vmatpush1.bf16.msra.mxu0 %v683
  %738 = vmatprep.subr.bf16.mxu0 0
  %739 = vmatpush1.bf16.msra.mxu0 %v684
  %740 = vmatprep.subr.bf16.mxu0 0
  %741 = vmatpush1.bf16.msra.mxu0 %v685
  %742 = vmatprep.subr.bf16.mxu0 0
  %743 = vmatpush1.bf16.msra.mxu0 %v686
  %744 = vmatprep.subr.bf16.mxu0 0
  %745 = vmatpush1.bf16.msra.mxu0 %v687
  %746 = vmatprep.subr.bf16.mxu0 0
  %747 = vmatpush1.bf16.msra.mxu0 %v688
  %748 = vmatprep.subr.bf16.mxu0 0
  %749 = vmatpush1.bf16.msra.mxu0 %v689
  %750 = vmatprep.subr.bf16.mxu0 0
  %751 = vmatpush1.bf16.msra.mxu0 %v690
  %752 = vmatprep.subr.bf16.mxu0 0
  %753 = vmatpush1.bf16.msra.mxu0 %v691
  %754 = vmatprep.subr.bf16.mxu0 0
  %755 = vmatpush1.bf16.msra.mxu0 %v692
  %756 = vmatprep.subr.bf16.mxu0 0
  %757 = vmatpush1.bf16.msra.mxu0 %v693
  %758 = vmatprep.mubr.bf16.mxu0 %v516
  %759 = vmatmul.mubr.bf16.gmra.mrb[0].mxu0 %v515
  %v760 = vpop.f32.mrb[0].mxu0
  %v761 = vadd.f32 %v580, %v760
  %v762 = vpop.f32.mrb[0].mxu0
  %v763 = vpop.f32.mrb[0].mxu0
  %v764 = vadd.f32 %v580, %v763
  %v765 = vpop.f32.mrb[0].mxu0
  %766 = vmatprep.mubr.bf16.mxu0 %v519
  %767 = vmatmul.mubr.bf16.gmra.mrb[0].mxu0 %v518
  %v768 = vpop.f32.mrb[0].mxu0
  %v769 = vadd.f32 %v580, %v768
  %v770 = vpop.f32.mrb[0].mxu0
  %v771 = vpop.f32.mrb[0].mxu0
  %v772 = vadd.f32 %v580, %v771
  %v773 = vpop.f32.mrb[0].mxu0
  %774 = vmatprep.mubr.bf16.mxu0 %v522
  %775 = vmatmul.mubr.bf16.gmra.mrb[0].mxu0 %v521
  %v776 = vpop.f32.mrb[0].mxu0
  %v777 = vadd.f32 %v580, %v776
  %v778 = vpop.f32.mrb[0].mxu0
  %v779 = vpop.f32.mrb[0].mxu0
  %v780 = vadd.f32 %v580, %v779
  %v781 = vpop.f32.mrb[0].mxu0
  %782 = vmatprep.mubr.bf16.mxu0 %v525
  %783 = vmatmul.mubr.bf16.gmra.mrb[0].mxu0 %v524
  %v784 = vpop.f32.mrb[0].mxu0
  %v785 = vadd.f32 %v580, %v784
  %v786 = vpop.f32.mrb[0].mxu0
  %v787 = vpop.f32.mrb[0].mxu0
  %v788 = vadd.f32 %v580, %v787
  %v789 = vpop.f32.mrb[0].mxu0
  %790 = vdwg.mxu0
  %791 = vmatprep.subr.bf16.mxu0 0
  %792 = vmatpush1.bf16.msra.mxu0 %v694
  %793 = vmatprep.subr.bf16.mxu0 0
  %794 = vmatpush1.bf16.msra.mxu0 %v695
  %795 = vmatprep.subr.bf16.mxu0 0
  %796 = vmatpush1.bf16.msra.mxu0 %v696
  %797 = vmatprep.subr.bf16.mxu0 0
  %798 = vmatpush1.bf16.msra.mxu0 %v697
  %799 = vmatprep.subr.bf16.mxu0 0
  %800 = vmatpush1.bf16.msra.mxu0 %v698
  %801 = vmatprep.subr.bf16.mxu0 0
  %802 = vmatpush1.bf16.msra.mxu0 %v699
  %803 = vmatprep.subr.bf16.mxu0 0
  %804 = vmatpush1.bf16.msra.mxu0 %v700
  %805 = vmatprep.subr.bf16.mxu0 0
  %806 = vmatpush1.bf16.msra.mxu0 %v701
  %807 = vmatprep.subr.bf16.mxu0 0
  %808 = vmatpush1.bf16.msra.mxu0 0
  %809 = vmatprep.subr.bf16.mxu0 0
  %810 = vmatpush1.bf16.msra.mxu0 0
  %811 = vmatprep.subr.bf16.mxu0 0
  %812 = vmatpush1.bf16.msra.mxu0 0
  %813 = vmatprep.subr.bf16.mxu0 0
  %814 = vmatpush1.bf16.msra.mxu0 0
  %815 = vmatprep.subr.bf16.mxu0 0
  %816 = vmatpush1.bf16.msra.mxu0 0
  %817 = vmatprep.subr.bf16.mxu0 0
  %818 = vmatpush1.bf16.msra.mxu0 0
  %819 = vmatprep.subr.bf16.mxu0 0
  %820 = vmatpush1.bf16.msra.mxu0 0
  %821 = vmatprep.subr.bf16.mxu0 0
  %822 = vmatpush1.bf16.msra.mxu0 0
  %823 = vmatprep.mubr.bf16.mxu0 0
  %824 = vmatmul.mubr.bf16.gmra.mrb[0].mxu0 %v517
  %v825 = vpop.f32.mrb[0].mxu0
  %v826 = vadd.f32 %v761, %v825
  %v827 = vpop.f32.mrb[0].mxu0
  %v828 = vpop.f32.mrb[0].mxu0
  %v829 = vadd.f32 %v764, %v828
  %v830 = vpop.f32.mrb[0].mxu0
  %831 = vmatprep.mubr.bf16.mxu0 0
  %832 = vmatmul.mubr.bf16.gmra.mrb[0].mxu0 %v520
  %v833 = vpop.f32.mrb[0].mxu0
  %v834 = vadd.f32 %v769, %v833
  %v835 = vpop.f32.mrb[0].mxu0
  %v836 = vpop.f32.mrb[0].mxu0
  %v837 = vadd.f32 %v772, %v836
  %v838 = vpop.f32.mrb[0].mxu0
  %839 = vmatprep.mubr.bf16.mxu0 0
  %840 = vmatmul.mubr.bf16.gmra.mrb[0].mxu0 %v523
  %v841 = vpop.f32.mrb[0].mxu0
  %v842 = vadd.f32 %v777, %v841
  %v843 = vpop.f32.mrb[0].mxu0
  %v844 = vpop.f32.mrb[0].mxu0
  %v845 = vadd.f32 %v780, %v844
  %v846 = vpop.f32.mrb[0].mxu0
  %847 = vmatprep.mubr.bf16.mxu0 0
  %848 = vmatmul.mubr.bf16.gmra.mrb[0].mxu0 %v526
  %v849 = vpop.f32.mrb[0].mxu0
  %v850 = vadd.f32 %v785, %v849
  %v851 = vpop.f32.mrb[0].mxu0
  %v852 = vpop.f32.mrb[0].mxu0
  %v853 = vadd.f32 %v788, %v852
  %v854 = vpop.f32.mrb[0].mxu0
  %855 = vdwg.mxu0
  %vm856 = vcmp.ge.f32.partialorder %v826, 0.0
  %vm857 = vcmp.ge.f32.partialorder %v829, 0.0
  %vm858 = vcmp.ge.f32.partialorder %v834, 0.0
  %vm859 = vcmp.ge.f32.partialorder %v837, 0.0
  %vm860 = vcmp.ge.f32.partialorder %v842, 0.0
  %vm861 = vcmp.ge.f32.partialorder %v845, 0.0
  %vm862 = vcmp.ge.f32.partialorder %v850, 0.0
  %vm863 = vcmp.ge.f32.partialorder %v853, 0.0
  %v864 = vmul.f32 %v826, 0.2
  %v865 = vmul.f32 %v829, 0.2
  %v866 = vmul.f32 %v834, 0.2
  %v867 = vmul.f32 %v837, 0.2
  %v868 = vmul.f32 %v842, 0.2
  %v869 = vmul.f32 %v845, 0.2
  %v870 = vmul.f32 %v850, 0.2
  %v871 = vmul.f32 %v853, 0.2
  %v872 = vsel %vm856, %v826, %v864
  %v873 = vsel %vm857, %v829, %v865
  %v874 = vsel %vm858, %v834, %v866
  %v875 = vsel %vm859, %v837, %v867
  %v876 = vsel %vm860, %v842, %v868
  %v877 = vsel %vm861, %v845, %v869
  %v878 = vsel %vm862, %v850, %v870
  %v879 = vsel %vm863, %v853, %v871
  %v880 = vpack.c.bf16 %v873, 0.0
  %v881 = vpack.c.bf16 %v874, %v872
  %v882 = vpack.c.bf16 %v875, %v873
  %v883 = vpack.c.bf16 %v877, %v875
  %v884 = vpack.c.bf16 %v878, %v876
  %v885 = vpack.c.bf16 %v879, %v877
  %v886 = vld [vmem:[%s5] sm:$0xf]
  %v887 = vld [vmem:[%s5 + $0x4] sm:$0xf]
  %v888 = vld [vmem:[%s5 + $0x8] sm:$0xf]
  %v889 = vld [vmem:[%s5 + $0xc] sm:$0xf]
  %v890 = vld [vmem:[%s5 + $0x10] sm:$0xf]
  %v891 = vld [vmem:[%s5 + $0x14] sm:$0xf]
  %v892 = vld [vmem:[%s5 + $0x18] sm:$0xf]
  %v893 = vld [vmem:[%s5 + $0x1c] sm:$0xf]
  %v894 = vld [vmem:[%s5 + $0x20] sm:$0xf]
  %v895 = vld [vmem:[%s5 + $0x24] sm:$0xf]
  %v896 = vld [vmem:[%s5 + $0x28] sm:$0xf]
  %v897 = vld [vmem:[%s5 + $0x2c] sm:$0xf]
  %v898 = vld [vmem:[%s5 + $0x30] sm:$0xf]
  %v899 = vld [vmem:[%s5 + $0x34] sm:$0xf]
  %v900 = vld [vmem:[%s5 + $0x38] sm:$0xf]
  %v901 = vld [vmem:[%s5 + $0x3c] sm:$0xf]
  %v902 = vld [vmem:[%s5 + $0x40] sm:$0xf]
  %v903 = vld [vmem:[%s5 + $0x44] sm:$0xf]
  %v904 = vld [vmem:[%s5 + $0x48] sm:$0xf]
  %v905 = vld [vmem:[%s5 + $0x4c] sm:$0xf]
  %v906 = vld [vmem:[%s5 + $0x50] sm:$0xf]
  %v907 = vld [vmem:[%s5 + $0x54] sm:$0xf]
  %v908 = vld [vmem:[%s5 + $0x58] sm:$0xf]
  %v909 = vld [vmem:[%s5 + $0x5c] sm:$0xf]
  %v910 = vld [vmem:[%s5 + $0x60] sm:$0xf]
  %v911 = vld [vmem:[%s5 + $0x64] sm:$0xf]
  %v912 = vld [vmem:[%s5 + $0x68] sm:$0xf]
  %v913 = vld [vmem:[%s5 + $0x6c] sm:$0xf]
  %v914 = vld [vmem:[%s5 + $0x70] sm:$0xf]
  %v915 = vld [vmem:[%s5 + $0x74] sm:$0xf]
  %v916 = vld [vmem:[%s5 + $0x78] sm:$0xf]
  %v917 = vld [vmem:[%s5 + $0x7c] sm:$0xf]
  %v918 = vld [vmem:[%s5 + $0x80] sm:$0xf]
  %v919 = vld [vmem:[%s5 + $0x84] sm:$0xf]
  %v920 = vld [vmem:[%s5 + $0x88] sm:$0xf]
  %v921 = vld [vmem:[%s5 + $0x8c] sm:$0xf]
  %v922 = vld [vmem:[%s5 + $0x90] sm:$0xf]
  %v923 = vld [vmem:[%s5 + $0x94] sm:$0xf]
  %v924 = vld [vmem:[%s5 + $0x98] sm:$0xf]
  %v925 = vld [vmem:[%s5 + $0x9c] sm:$0xf]
  %v926 = vld [vmem:[%s5 + $0xa0] sm:$0xf]
  %v927 = vld [vmem:[%s5 + $0xa4] sm:$0xf]
  %v928 = vld [vmem:[%s5 + $0xa8] sm:$0xf]
  %v929 = vld [vmem:[%s5 + $0xac] sm:$0xf]
  %v930 = vld [vmem:[%s5 + $0xb0] sm:$0xf]
  %v931 = vld [vmem:[%s5 + $0xb4] sm:$0xf]
  %v932 = vld [vmem:[%s5 + $0xb8] sm:$0xf]
  %v933 = vld [vmem:[%s5 + $0xbc] sm:$0xf]
  %v934 = vld [vmem:[%s6] sm:$0x1]
  %v936 = vlaneseq
  %v937 = vshrl.u32 %v936, 7
  %v938 = vsub.s32 0, %v937
  %v939 = vrot.slane %v934, %v938
  %v989 = vunpack.c.l.b16 %v886
  %v990 = vunpack.c.l.b16 %v887
  %v991 = vunpack.c.l.b16 %v888
  %v992 = vunpack.c.l.b16 %v889
  %v993 = vunpack.c.l.b16 %v890
  %v994 = vunpack.c.l.b16 %v891
  %v995 = vunpack.c.l.b16 %v892
  %v996 = vunpack.c.l.b16 %v893
  %v997 = vunpack.c.l.b16 %v894
  %v998 = vunpack.c.l.b16 %v895
  %v999 = vunpack.c.l.b16 %v896
  %v1000 = vunpack.c.l.b16 %v897
  %v1001 = vunpack.c.l.b16 %v898
  %v1002 = vunpack.c.l.b16 %v899
  %v1003 = vunpack.c.l.b16 %v900
  %v1004 = vunpack.c.l.b16 %v901
  %v1005 = vunpack.c.l.b16 %v902
  %v1006 = vunpack.c.l.b16 %v903
  %v1007 = vunpack.c.l.b16 %v904
  %v1008 = vunpack.c.l.b16 %v905
  %v1009 = vunpack.c.l.b16 %v906
  %v1010 = vunpack.c.l.b16 %v907
  %v1011 = vunpack.c.l.b16 %v908
  %v1012 = vunpack.c.l.b16 %v909
  %v1013 = vunpack.c.l.b16 %v910
  %v1014 = vunpack.c.l.b16 %v911
  %v1015 = vunpack.c.l.b16 %v912
  %v1016 = vunpack.c.l.b16 %v913
  %v1017 = vunpack.c.l.b16 %v914
  %v1018 = vunpack.c.l.b16 %v915
  %v1019 = vunpack.c.l.b16 %v916
  %v1020 = vunpack.c.l.b16 %v917
  %v1021 = vunpack.c.l.b16 %v918
  %v1022 = vunpack.c.l.b16 %v919
  %v1023 = vunpack.c.l.b16 %v920
  %v1024 = vunpack.c.l.b16 %v921
  %v1025 = vunpack.c.l.b16 %v922
  %v1026 = vunpack.c.l.b16 %v923
  %v1027 = vunpack.c.l.b16 %v924
  %v1028 = vunpack.c.l.b16 %v925
  %v1029 = vunpack.c.l.b16 %v926
  %v1030 = vunpack.c.l.b16 %v927
  %v1031 = vunpack.c.l.b16 %v928
  %v1032 = vunpack.c.l.b16 %v929
  %v1033 = vunpack.c.l.b16 %v930
  %v1034 = vunpack.c.l.b16 %v931
  %v1035 = vunpack.c.l.b16 %v932
  %v1036 = vunpack.c.l.b16 %v933
  %v1037 = vpack.c.b16 %v990, %v989
  %v1038 = vpack.c.b16 %v992, %v991
  %v1039 = vpack.c.b16 %v994, %v993
  %v1040 = vpack.c.b16 %v996, %v995
  %v1041 = vpack.c.b16 %v998, %v997
  %v1042 = vpack.c.b16 %v1000, %v999
  %v1043 = vpack.c.b16 %v1002, %v1001
  %v1044 = vpack.c.b16 %v1004, %v1003
  %v1045 = vpack.c.b16 %v1006, %v1005
  %v1046 = vpack.c.b16 %v1008, %v1007
  %v1047 = vpack.c.b16 %v1010, %v1009
  %v1048 = vpack.c.b16 %v1012, %v1011
  %v1049 = vpack.c.b16 %v1014, %v1013
  %v1050 = vpack.c.b16 %v1016, %v1015
  %v1051 = vpack.c.b16 %v1018, %v1017
  %v1052 = vpack.c.b16 %v1020, %v1019
  %v1053 = vpack.c.b16 %v1022, %v1021
  %v1054 = vpack.c.b16 %v1024, %v1023
  %v1055 = vpack.c.b16 %v1026, %v1025
  %v1056 = vpack.c.b16 %v1028, %v1027
  %v1057 = vpack.c.b16 %v1030, %v1029
  %v1058 = vpack.c.b16 %v1032, %v1031
  %v1059 = vpack.c.b16 %v1034, %v1033
  %v1060 = vpack.c.b16 %v1036, %v1035
  %1085 = vmatprep.subr.bf16.mxu0 0
  %1086 = vmatpush1.bf16.msra.mxu0 %v1037
  %1087 = vmatprep.subr.bf16.mxu0 0
  %1088 = vmatpush1.bf16.msra.mxu0 %v1038
  %1089 = vmatprep.subr.bf16.mxu0 0
  %1090 = vmatpush1.bf16.msra.mxu0 %v1039
  %1091 = vmatprep.subr.bf16.mxu0 0
  %1092 = vmatpush1.bf16.msra.mxu0 %v1040
  %1093 = vmatprep.subr.bf16.mxu0 0
  %1094 = vmatpush1.bf16.msra.mxu0 %v1041
  %1095 = vmatprep.subr.bf16.mxu0 0
  %1096 = vmatpush1.bf16.msra.mxu0 %v1042
  %1097 = vmatprep.subr.bf16.mxu0 0
  %1098 = vmatpush1.bf16.msra.mxu0 %v1043
  %1099 = vmatprep.subr.bf16.mxu0 0
  %1100 = vmatpush1.bf16.msra.mxu0 %v1044
  %1101 = vmatprep.subr.bf16.mxu0 0
  %1102 = vmatpush1.bf16.msra.mxu0 %v1045
  %1103 = vmatprep.subr.bf16.mxu0 0
  %1104 = vmatpush1.bf16.msra.mxu0 %v1046
  %1105 = vmatprep.subr.bf16.mxu0 0
  %1106 = vmatpush1.bf16.msra.mxu0 %v1047
  %1107 = vmatprep.subr.bf16.mxu0 0
  %1108 = vmatpush1.bf16.msra.mxu0 %v1048
  %1109 = vmatprep.subr.bf16.mxu0 0
  %1110 = vmatpush1.bf16.msra.mxu0 %v1049
  %1111 = vmatprep.subr.bf16.mxu0 0
  %1112 = vmatpush1.bf16.msra.mxu0 %v1050
  %1113 = vmatprep.subr.bf16.mxu0 0
  %1114 = vmatpush1.bf16.msra.mxu0 %v1051
  %1115 = vmatprep.subr.bf16.mxu0 0
  %1116 = vmatpush1.bf16.msra.mxu0 %v1052
  %1117 = vmatprep.mubr.bf16.mxu0 %v881
  %1118 = vmatmul.mubr.bf16.gmra.mrb[0].mxu0 %v880
  %v1119 = vpop.f32.mrb[0].mxu0
  %v1120 = vadd.f32 %v939, %v1119
  %v1121 = vpop.f32.mrb[0].mxu0
  %v1122 = vpop.f32.mrb[0].mxu0
  %v1123 = vadd.f32 %v939, %v1122
  %v1124 = vpop.f32.mrb[0].mxu0
  %1125 = vmatprep.mubr.bf16.mxu0 %v884
  %1126 = vmatmul.mubr.bf16.gmra.mrb[0].mxu0 %v883
  %v1127 = vpop.f32.mrb[0].mxu0
  %v1128 = vadd.f32 %v939, %v1127
  %v1129 = vpop.f32.mrb[0].mxu0
  %v1130 = vpop.f32.mrb[0].mxu0
  %v1131 = vadd.f32 %v939, %v1130
  %v1132 = vpop.f32.mrb[0].mxu0
  %1133 = vdwg.mxu0
  %1134 = vmatprep.subr.bf16.mxu0 0
  %1135 = vmatpush1.bf16.msra.mxu0 %v1053
  %1136 = vmatprep.subr.bf16.mxu0 0
  %1137 = vmatpush1.bf16.msra.mxu0 %v1054
  %1138 = vmatprep.subr.bf16.mxu0 0
  %1139 = vmatpush1.bf16.msra.mxu0 %v1055
  %1140 = vmatprep.subr.bf16.mxu0 0
  %1141 = vmatpush1.bf16.msra.mxu0 %v1056
  %1142 = vmatprep.subr.bf16.mxu0 0
  %1143 = vmatpush1.bf16.msra.mxu0 %v1057
  %1144 = vmatprep.subr.bf16.mxu0 0
  %1145 = vmatpush1.bf16.msra.mxu0 %v1058
  %1146 = vmatprep.subr.bf16.mxu0 0
  %1147 = vmatpush1.bf16.msra.mxu0 %v1059
  %1148 = vmatprep.subr.bf16.mxu0 0
  %1149 = vmatpush1.bf16.msra.mxu0 %v1060
  %1150 = vmatprep.subr.bf16.mxu0 0
  %1151 = vmatpush1.bf16.msra.mxu0 0
  %1152 = vmatprep.subr.bf16.mxu0 0
  %1153 = vmatpush1.bf16.msra.mxu0 0
  %1154 = vmatprep.subr.bf16.mxu0 0
  %1155 = vmatpush1.bf16.msra.mxu0 0
  %1156 = vmatprep.subr.bf16.mxu0 0
  %1157 = vmatpush1.bf16.msra.mxu0 0
  %1158 = vmatprep.subr.bf16.mxu0 0
  %1159 = vmatpush1.bf16.msra.mxu0 0
  %1160 = vmatprep.subr.bf16.mxu0 0
  %1161 = vmatpush1.bf16.msra.mxu0 0
  %1162 = vmatprep.subr.bf16.mxu0 0
  %1163 = vmatpush1.bf16.msra.mxu0 0
  %1164 = vmatprep.subr.bf16.mxu0 0
  %1165 = vmatpush1.bf16.msra.mxu0 0
  %1166 = vmatprep.mubr.bf16.mxu0 0
  %1167 = vmatmul.mubr.bf16.gmra.mrb[0].mxu0 %v882
  %v1168 = vpop.f32.mrb[0].mxu0
  %v1169 = vadd.f32 %v1120, %v1168
  %v1170 = vpop.f32.mrb[0].mxu0
  %v1171 = vpop.f32.mrb[0].mxu0
  %v1172 = vadd.f32 %v1123, %v1171
  %v1173 = vpop.f32.mrb[0].mxu0
  %1174 = vmatprep.mubr.bf16.mxu0 0
  %1175 = vmatmul.mubr.bf16.gmra.mrb[0].mxu0 %v885
  %v1176 = vpop.f32.mrb[0].mxu0
  %v1177 = vadd.f32 %v1128, %v1176
  %v1178 = vpop.f32.mrb[0].mxu0
  %v1179 = vpop.f32.mrb[0].mxu0
  %v1180 = vadd.f32 %v1131, %v1179
  %v1181 = vpop.f32.mrb[0].mxu0
  %1182 = vdwg.mxu0
  %vm1183 = vcmp.ge.f32.partialorder %v1169, 0.0
  %vm1184 = vcmp.ge.f32.partialorder %v1172, 0.0
  %vm1185 = vcmp.ge.f32.partialorder %v1177, 0.0
  %vm1186 = vcmp.ge.f32.partialorder %v1180, 0.0
  %v1187 = vmul.f32 %v1169, 0.2
  %v1188 = vmul.f32 %v1172, 0.2
  %v1189 = vmul.f32 %v1177, 0.2
  %v1190 = vmul.f32 %v1180, 0.2
  %v1191 = vsel %vm1183, %v1169, %v1187
  %v1192 = vsel %vm1184, %v1172, %v1188
  %v1193 = vsel %vm1185, %v1177, %v1189
  %v1194 = vsel %vm1186, %v1180, %v1190
  %v1195 = vpack.c.bf16 %v1191, %v1191
  %v1196 = vpack.c.bf16 %v1192, %v1192
  %v1197 = vpack.c.bf16 %v1193, %v1193
  %v1198 = vpack.c.bf16 %v1194, %v1194
  %v1199 = vld [vmem:[%s7] sm:$0xf]
  %v1200 = vld [vmem:[%s7 + $0x4] sm:$0xf]
  %v1201 = vld [vmem:[%s7 + $0x8] sm:$0xf]
  %v1202 = vld [vmem:[%s7 + $0xc] sm:$0xf]
  %v1203 = vld [vmem:[%s7 + $0x10] sm:$0xf]
  %v1204 = vld [vmem:[%s7 + $0x14] sm:$0xf]
  %v1205 = vld [vmem:[%s7 + $0x18] sm:$0xf]
  %v1206 = vld [vmem:[%s7 + $0x1c] sm:$0xf]
  %v1207 = vld [vmem:[%s7 + $0x20] sm:$0xf]
  %v1208 = vld [vmem:[%s7 + $0x24] sm:$0xf]
  %v1209 = vld [vmem:[%s7 + $0x28] sm:$0xf]
  %v1210 = vld [vmem:[%s7 + $0x2c] sm:$0xf]
  %v1211 = vld [vmem:[%s7 + $0x30] sm:$0xf]
  %v1212 = vld [vmem:[%s7 + $0x34] sm:$0xf]
  %v1213 = vld [vmem:[%s7 + $0x38] sm:$0xf]
  %v1214 = vld [vmem:[%s7 + $0x3c] sm:$0xf]
  %v1215 = vld [vmem:[%s7 + $0x40] sm:$0xf]
  %v1216 = vld [vmem:[%s7 + $0x44] sm:$0xf]
  %v1217 = vld [vmem:[%s7 + $0x48] sm:$0xf]
  %v1218 = vld [vmem:[%s7 + $0x4c] sm:$0xf]
  %v1219 = vld [vmem:[%s7 + $0x50] sm:$0xf]
  %v1220 = vld [vmem:[%s7 + $0x54] sm:$0xf]
  %v1221 = vld [vmem:[%s7 + $0x58] sm:$0xf]
  %v1222 = vld [vmem:[%s7 + $0x5c] sm:$0xf]
  %v1223 = vld [vmem:[%s7 + $0x60] sm:$0xf]
  %v1224 = vld [vmem:[%s7 + $0x64] sm:$0xf]
  %v1225 = vld [vmem:[%s7 + $0x68] sm:$0xf]
  %v1226 = vld [vmem:[%s7 + $0x6c] sm:$0xf]
  %v1227 = vld [vmem:[%s7 + $0x70] sm:$0xf]
  %v1228 = vld [vmem:[%s7 + $0x74] sm:$0xf]
  %v1229 = vld [vmem:[%s7 + $0x78] sm:$0xf]
  %v1230 = vld [vmem:[%s7 + $0x7c] sm:$0xf]
  %v1231 = vld [vmem:[%s7 + $0x80] sm:$0xf]
  %v1232 = vld [vmem:[%s7 + $0x84] sm:$0xf]
  %v1233 = vld [vmem:[%s7 + $0x88] sm:$0xf]
  %v1234 = vld [vmem:[%s7 + $0x8c] sm:$0xf]
  %v1235 = vld [vmem:[%s7 + $0x90] sm:$0xf]
  %v1236 = vld [vmem:[%s7 + $0x94] sm:$0xf]
  %v1237 = vld [vmem:[%s7 + $0x98] sm:$0xf]
  %v1238 = vld [vmem:[%s7 + $0x9c] sm:$0xf]
  %v1239 = vld [vmem:[%s7 + $0xa0] sm:$0xf]
  %v1240 = vld [vmem:[%s7 + $0xa4] sm:$0xf]
  %v1241 = vld [vmem:[%s7 + $0xa8] sm:$0xf]
  %v1242 = vld [vmem:[%s7 + $0xac] sm:$0xf]
  %v1243 = vld [vmem:[%s7 + $0xb0] sm:$0xf]
  %v1244 = vld [vmem:[%s7 + $0xb4] sm:$0xf]
  %v1245 = vld [vmem:[%s7 + $0xb8] sm:$0xf]
  %v1246 = vld [vmem:[%s7 + $0xbc] sm:$0xf]
  %v1247 = vld [vmem:[%s7 + $0xc0] sm:$0xf]
  %v1248 = vld [vmem:[%s7 + $0xc4] sm:$0xf]
  %v1249 = vld [vmem:[%s7 + $0xc8] sm:$0xf]
  %v1250 = vld [vmem:[%s7 + $0xcc] sm:$0xf]
  %v1251 = vld [vmem:[%s7 + $0xd0] sm:$0xf]
  %v1252 = vld [vmem:[%s7 + $0xd4] sm:$0xf]
  %v1253 = vld [vmem:[%s7 + $0xd8] sm:$0xf]
  %v1254 = vld [vmem:[%s7 + $0xdc] sm:$0xf]
  %v1255 = vld [vmem:[%s7 + $0xe0] sm:$0xf]
  %v1256 = vld [vmem:[%s7 + $0xe4] sm:$0xf]
  %v1257 = vld [vmem:[%s7 + $0xe8] sm:$0xf]
  %v1258 = vld [vmem:[%s7 + $0xec] sm:$0xf]
  %v1259 = vld [vmem:[%s7 + $0xf0] sm:$0xf]
  %v1260 = vld [vmem:[%s7 + $0xf4] sm:$0xf]
  %v1261 = vld [vmem:[%s7 + $0xf8] sm:$0xf]
  %v1262 = vld [vmem:[%s7 + $0xfc] sm:$0xf]
  %v1263 = vld [vmem:[%s8] sm:$0x1]
  %v1265 = vlaneseq
  %v1266 = vshrl.u32 %v1265, 7
  %v1267 = vsub.s32 0, %v1266
  %v1268 = vrot.slane %v1263, %v1267
  %v1334 = vunpack.c.l.b16 %v1199
  %v1335 = vunpack.c.l.b16 %v1200
  %v1336 = vunpack.c.l.b16 %v1201
  %v1337 = vunpack.c.l.b16 %v1202
  %v1338 = vunpack.c.l.b16 %v1203
  %v1339 = vunpack.c.l.b16 %v1204
  %v1340 = vunpack.c.l.b16 %v1205
  %v1341 = vunpack.c.l.b16 %v1206
  %v1342 = vunpack.c.l.b16 %v1207
  %v1343 = vunpack.c.l.b16 %v1208
  %v1344 = vunpack.c.l.b16 %v1209
  %v1345 = vunpack.c.l.b16 %v1210
  %v1346 = vunpack.c.l.b16 %v1211
  %v1347 = vunpack.c.l.b16 %v1212
  %v1348 = vunpack.c.l.b16 %v1213
  %v1349 = vunpack.c.l.b16 %v1214
  %v1350 = vunpack.c.l.b16 %v1215
  %v1351 = vunpack.c.l.b16 %v1216
  %v1352 = vunpack.c.l.b16 %v1217
  %v1353 = vunpack.c.l.b16 %v1218
  %v1354 = vunpack.c.l.b16 %v1219
  %v1355 = vunpack.c.l.b16 %v1220
  %v1356 = vunpack.c.l.b16 %v1221
  %v1357 = vunpack.c.l.b16 %v1222
  %v1358 = vunpack.c.l.b16 %v1223
  %v1359 = vunpack.c.l.b16 %v1224
  %v1360 = vunpack.c.l.b16 %v1225
  %v1361 = vunpack.c.l.b16 %v1226
  %v1362 = vunpack.c.l.b16 %v1227
  %v1363 = vunpack.c.l.b16 %v1228
  %v1364 = vunpack.c.l.b16 %v1229
  %v1365 = vunpack.c.l.b16 %v1230
  %v1366 = vunpack.c.l.b16 %v1231
  %v1367 = vunpack.c.l.b16 %v1232
  %v1368 = vunpack.c.l.b16 %v1233
  %v1369 = vunpack.c.l.b16 %v1234
  %v1370 = vunpack.c.l.b16 %v1235
  %v1371 = vunpack.c.l.b16 %v1236
  %v1372 = vunpack.c.l.b16 %v1237
  %v1373 = vunpack.c.l.b16 %v1238
  %v1374 = vunpack.c.l.b16 %v1239
  %v1375 = vunpack.c.l.b16 %v1240
  %v1376 = vunpack.c.l.b16 %v1241
  %v1377 = vunpack.c.l.b16 %v1242
  %v1378 = vunpack.c.l.b16 %v1243
  %v1379 = vunpack.c.l.b16 %v1244
  %v1380 = vunpack.c.l.b16 %v1245
  %v1381 = vunpack.c.l.b16 %v1246
  %v1382 = vunpack.c.l.b16 %v1247
  %v1383 = vunpack.c.l.b16 %v1248
  %v1384 = vunpack.c.l.b16 %v1249
  %v1385 = vunpack.c.l.b16 %v1250
  %v1386 = vunpack.c.l.b16 %v1251
  %v1387 = vunpack.c.l.b16 %v1252
  %v1388 = vunpack.c.l.b16 %v1253
  %v1389 = vunpack.c.l.b16 %v1254
  %v1390 = vunpack.c.l.b16 %v1255
  %v1391 = vunpack.c.l.b16 %v1256
  %v1392 = vunpack.c.l.b16 %v1257
  %v1393 = vunpack.c.l.b16 %v1258
  %v1394 = vunpack.c.l.b16 %v1259
  %v1395 = vunpack.c.l.b16 %v1260
  %v1396 = vunpack.c.l.b16 %v1261
  %v1397 = vunpack.c.l.b16 %v1262
  %v1398 = vpack.c.b16 %v1335, %v1334
  %v1399 = vpack.c.b16 %v1337, %v1336
  %v1400 = vpack.c.b16 %v1339, %v1338
  %v1401 = vpack.c.b16 %v1341, %v1340
  %v1402 = vpack.c.b16 %v1343, %v1342
  %v1403 = vpack.c.b16 %v1345, %v1344
  %v1404 = vpack.c.b16 %v1347, %v1346
  %v1405 = vpack.c.b16 %v1349, %v1348
  %v1406 = vpack.c.b16 %v1351, %v1350
  %v1407 = vpack.c.b16 %v1353, %v1352
  %v1408 = vpack.c.b16 %v1355, %v1354
  %v1409 = vpack.c.b16 %v1357, %v1356
  %v1410 = vpack.c.b16 %v1359, %v1358
  %v1411 = vpack.c.b16 %v1361, %v1360
  %v1412 = vpack.c.b16 %v1363, %v1362
  %v1413 = vpack.c.b16 %v1365, %v1364
  %v1414 = vpack.c.b16 %v1367, %v1366
  %v1415 = vpack.c.b16 %v1369, %v1368
  %v1416 = vpack.c.b16 %v1371, %v1370
  %v1417 = vpack.c.b16 %v1373, %v1372
  %v1418 = vpack.c.b16 %v1375, %v1374
  %v1419 = vpack.c.b16 %v1377, %v1376
  %v1420 = vpack.c.b16 %v1379, %v1378
  %v1421 = vpack.c.b16 %v1381, %v1380
  %v1422 = vpack.c.b16 %v1383, %v1382
  %v1423 = vpack.c.b16 %v1385, %v1384
  %v1424 = vpack.c.b16 %v1387, %v1386
  %v1425 = vpack.c.b16 %v1389, %v1388
  %v1426 = vpack.c.b16 %v1391, %v1390
  %v1427 = vpack.c.b16 %v1393, %v1392
  %v1428 = vpack.c.b16 %v1395, %v1394
  %v1429 = vpack.c.b16 %v1397, %v1396
  %1462 = vmatprep.subr.bf16.mxu0 0
  %1463 = vmatpush1.bf16.msra.mxu0 %v1398
  %1464 = vmatprep.subr.bf16.mxu0 0
  %1465 = vmatpush1.bf16.msra.mxu0 %v1399
  %1466 = vmatprep.subr.bf16.mxu0 0
  %1467 = vmatpush1.bf16.msra.mxu0 %v1400
  %1468 = vmatprep.subr.bf16.mxu0 0
  %1469 = vmatpush1.bf16.msra.mxu0 %v1401
  %1470 = vmatprep.subr.bf16.mxu0 0
  %1471 = vmatpush1.bf16.msra.mxu0 %v1402
  %1472 = vmatprep.subr.bf16.mxu0 0
  %1473 = vmatpush1.bf16.msra.mxu0 %v1403
  %1474 = vmatprep.subr.bf16.mxu0 0
  %1475 = vmatpush1.bf16.msra.mxu0 %v1404
  %1476 = vmatprep.subr.bf16.mxu0 0
  %1477 = vmatpush1.bf16.msra.mxu0 %v1405
  %1478 = vmatprep.subr.bf16.mxu0 0
  %1479 = vmatpush1.bf16.msra.mxu0 %v1406
  %1480 = vmatprep.subr.bf16.mxu0 0
  %1481 = vmatpush1.bf16.msra.mxu0 %v1407
  %1482 = vmatprep.subr.bf16.mxu0 0
  %1483 = vmatpush1.bf16.msra.mxu0 %v1408
  %1484 = vmatprep.subr.bf16.mxu0 0
  %1485 = vmatpush1.bf16.msra.mxu0 %v1409
  %1486 = vmatprep.subr.bf16.mxu0 0
  %1487 = vmatpush1.bf16.msra.mxu0 %v1410
  %1488 = vmatprep.subr.bf16.mxu0 0
  %1489 = vmatpush1.bf16.msra.mxu0 %v1411
  %1490 = vmatprep.subr.bf16.mxu0 0
  %1491 = vmatpush1.bf16.msra.mxu0 %v1412
  %1492 = vmatprep.subr.bf16.mxu0 0
  %1493 = vmatpush1.bf16.msra.mxu0 %v1413
  %1494 = vmatprep.mubr.bf16.mxu0 %v1196
  %1495 = vmatmul.mubr.bf16.gmra.mrb[0].mxu0 %v1195
  %v1496 = vpop.f32.mrb[0].mxu0
  %v1497 = vadd.f32 %v1268, %v1496
  %v1498 = vpop.f32.mrb[0].mxu0
  %v1499 = vpop.f32.mrb[0].mxu0
  %v1500 = vpop.f32.mrb[0].mxu0
  %1501 = vdwg.mxu0
  %1502 = vmatprep.subr.bf16.mxu0 0
  %1503 = vmatpush1.bf16.msra.mxu0 %v1414
  %1504 = vmatprep.subr.bf16.mxu0 0
  %1505 = vmatpush1.bf16.msra.mxu0 %v1415
  %1506 = vmatprep.subr.bf16.mxu0 0
  %1507 = vmatpush1.bf16.msra.mxu0 %v1416
  %1508 = vmatprep.subr.bf16.mxu0 0
  %1509 = vmatpush1.bf16.msra.mxu0 %v1417
  %1510 = vmatprep.subr.bf16.mxu0 0
  %1511 = vmatpush1.bf16.msra.mxu0 %v1418
  %1512 = vmatprep.subr.bf16.mxu0 0
  %1513 = vmatpush1.bf16.msra.mxu0 %v1419
  %1514 = vmatprep.subr.bf16.mxu0 0
  %1515 = vmatpush1.bf16.msra.mxu0 %v1420
  %1516 = vmatprep.subr.bf16.mxu0 0
  %1517 = vmatpush1.bf16.msra.mxu0 %v1421
  %1518 = vmatprep.subr.bf16.mxu0 0
  %1519 = vmatpush1.bf16.msra.mxu0 %v1422
  %1520 = vmatprep.subr.bf16.mxu0 0
  %1521 = vmatpush1.bf16.msra.mxu0 %v1423
  %1522 = vmatprep.subr.bf16.mxu0 0
  %1523 = vmatpush1.bf16.msra.mxu0 %v1424
  %1524 = vmatprep.subr.bf16.mxu0 0
  %1525 = vmatpush1.bf16.msra.mxu0 %v1425
  %1526 = vmatprep.subr.bf16.mxu0 0
  %1527 = vmatpush1.bf16.msra.mxu0 %v1426
  %1528 = vmatprep.subr.bf16.mxu0 0
  %1529 = vmatpush1.bf16.msra.mxu0 %v1427
  %1530 = vmatprep.subr.bf16.mxu0 0
  %1531 = vmatpush1.bf16.msra.mxu0 %v1428
  %1532 = vmatprep.subr.bf16.mxu0 0
  %1533 = vmatpush1.bf16.msra.mxu0 %v1429
  %1534 = vmatprep.mubr.bf16.mxu0 %v1198
  %1535 = vmatmul.mubr.bf16.gmra.mrb[0].mxu0 %v1197
  %v1536 = vpop.f32.mrb[0].mxu0
  %v1537 = vadd.f32 %v1497, %v1536
  %v1538 = vpop.f32.mrb[0].mxu0
  %v1539 = vpop.f32.mrb[0].mxu0
  %v1540 = vpop.f32.mrb[0].mxu0
  %1541 = vdwg.mxu0
  %vm1542 = vcmp.ge.f32.partialorder %v1537, 0.0
  %v1543 = vmul.f32 %v1537, 0.2
  %v1544 = vsel %vm1542, %v1537, %v1543
  %v1545 = vld [vmem:[%s9] sm:$0x1]
  %v1547 = vlaneseq
  %v1548 = vshrl.u32 %v1547, 7
  %v1549 = vsub.s32 0, %v1548
  %v1550 = vrot.slane %v1545, %v1549
  %v1552 = vmul.f32 %v1544, %v1550
  %vm1553 = vcmask 523264
  %v1554 = vsel %vm1553, %v1552, 0.0
  %1555 = vadd.xlane.f32.xlu0 %v1554
  %v1556 = vpop.xlane.xlu0 %1555
  %v1557 = vld [vmem:[#allocation2] sm:$0x1]
  %v1559 = vlaneseq
  %v1560 = vshrl.u32 %v1559, 7
  %v1561 = vsub.s32 0, %v1560
  %v1562 = vrot.slane %v1557, %v1561
  %v1564 = vadd.f32 %v1556, %v1562
  %v1565 = vand.u32 2147483647, %v1564
  %v1566 = vsub.f32 0.0, %v1565
  %v1567 = vmul.f32 %v1566, 1.442695
  %v1568 = vpow.pop %v1567
  %v1569 = vadd.f32 %v1568, 1.0
  %v1570 = vlog2.pop %v1569
  %v1571 = vmul.f32 %v1570, 0.6931472
  %v1572 = vmax.f32 %v1564, 0.0
  %v1573 = vadd.f32 %v1572, %v1571
  %v1574 = vsub.f32 0.0, %v1564
  %v1575 = vmax.f32 %v1574, 0.0
  %v1576 = vadd.f32 %v1575, %v1571
  %vm1577 = vcmask 1024
  %v1578 = vsel %vm1577, %v1576, 0.0
  %1579 = vadd.xlane.f32.xlu0 %v1578
  %v1580 = vpop.xlane.xlu0 %1579
  %v1581 = vrot.slane %v1580, 4
  %v1582 = vadd.f32 %v1580, %v1581
  %v1583 = vrot.slane %v1582, 2
  %v1584 = vadd.f32 %v1582, %v1583
  %v1585 = vrot.slane %v1584, 1
  %v1586 = vadd.f32 %v1584, %v1585
  %s1587 = vtos %v1586
  %s1588 = smul.f32 %s1587, 0.5
  %v1590 = vrot.slane %v1576, 2
  %v1592 = vsel %vm1577, %v1590, 0.0
  %1593 = vadd.xlane.f32.xlu0 %v1592
  %v1594 = vpop.xlane.xlu0 %1593
  %v1595 = vrot.slane %v1594, 4
  %v1596 = vadd.f32 %v1594, %v1595
  %v1597 = vrot.slane %v1596, 2
  %v1598 = vadd.f32 %v1596, %v1597
  %v1599 = vrot.slane %v1598, 1
  %v1600 = vadd.f32 %v1598, %v1599
  %s1601 = vtos %v1600
  %v1602 = vsel %vm1577, %v1573, 0.0
  %1603 = vadd.xlane.f32.xlu0 %v1602
  %v1604 = vpop.xlane.xlu0 %1603
  %v1605 = vrot.slane %v1604, 4
  %v1606 = vadd.f32 %v1604, %v1605
  %v1607 = vrot.slane %v1606, 2
  %v1608 = vadd.f32 %v1606, %v1607
  %v1609 = vrot.slane %v1608, 1
  %v1610 = vadd.f32 %v1608, %v1609
  %s1611 = vtos %v1610
  %s1612 = sadd.f32 %s1601, %s1611
  %s1613 = smul.f32 %s1612, 0.5
  %v1614 = vlaneseq
  %v1615 = vand.u32 %v1614, 127
  %vm1616 = vcmp.eq.s32.totalorder %v1615, 0
  %v1617 = vstv %s1588
  %v1618 = vstv %s1613
  %v1619 = vsel %vm1616, %v1617, %v1618
  %vm1620 = vcmask 8192
  %1621 = vst.msk [vmem:[%s11] sm:$0x1] %vm1620, %v1619
  // Predicated region
  $region46: #{adversarial_forward.1} parent=0 // pred_check
    _
  $region47: #{adversarial_forward.1} parent=0 // pred_check_branch
    %1623 = sbr.rel (0) target = $region49
  $region48: #{adversarial_forward.1} parent=0 // pred_region
    _
  $region49: #{adversarial_forward.1} parent=0 // pred_fallthru
    _
  // Predicated region
  $region50: #{adversarial_forward.1} parent=0 // pred_check
    _
  $region51: #{adversarial_forward.1} parent=0 // pred_check_branch
    %1625 = sbr.rel (0) target = $region53
  $region52: #{adversarial_forward.1} parent=0 // pred_region
    _
  $region53: #{adversarial_forward.1} parent=0 // pred_fallthru
    _

</llo_original>
